<compile_context>
chip_gen: v7x
topology: tpu7x:2x2x1
jax: 0.10.0
libtpu: 0.0.40
codegen_flags: <defaults>
</compile_context>

<pallas_src>
import functools

import jax
import jax.numpy as jnp
from jax.experimental import pallas as pl
from jax.experimental.pallas import tpu as pltpu

EPS = 1e-5  # BatchNorm2d default eps


# ---------------------------------------------------------------------------
# Fused Pallas kernel for the whole block
# ---------------------------------------------------------------------------
def _block_kernel(x_ref, w1_ref, b1_ref, w2_ref, b2_ref, out_ref,
                  xp_sc, h1p_sc, *, h, w, l0):
    """Fully fused ResNet basic block, lane-dense (C, H*W) layout.

    x_ref  : (1, Cin, H*W)   bf16   input image (flattened NCHW)
    w1_ref : (9, Cmid, Cin)  bf16   conv1 weights (BN1 scale folded), tap-major
    b1_ref : (Cmid, 1)       f32    BN1 bias
    w2_ref : (9, Cout, Cmid) bf16   conv2 weights (BN2 scale folded)
    b2_ref : (Cout, 1)       f32    BN2 bias
    out_ref: (1, Cout, H*W)  bf16
    xp_sc  : (Cin,  PADW)    bf16   1-row-padded flattened input  (interior @ l0)
    h1p_sc : (Cmid, PADW)    bf16   1-row-padded flattened h1     (interior @ l0)
    """
    hw = h * w

    # Column-edge keep-masks for the left / right kernel taps (hoisted, reused
    # by both convs).
    col = jax.lax.broadcasted_iota(jnp.int32, (x_ref.shape[1], hw), 1) % w
    keep_l = col != 0          # input column c-1 exists
    keep_r = col != (w - 1)    # input column c+1 exists

    def conv3x3(src_sc, wt_ref):
        """3x3 conv as 9 accumulating (Cout,Cin)x(Cin,HW) MXU matmuls."""
        cout = wt_ref.shape[1]
        zero = jnp.zeros((src_sc.shape[0], hw), src_sc.dtype)
        acc = jnp.zeros((cout, hw), jnp.float32)
        for dy in range(3):
            for dx in range(3):
                # lane-shifted view of the 1-row-padded flattened image
                s = l0 + (dy - 1) * w + (dx - 1)
                op = src_sc[:, s:s + hw]
                if dx == 0:
                    op = jnp.where(keep_l, op, zero)
                elif dx == 2:
                    op = jnp.where(keep_r, op, zero)
                acc = acc + jnp.dot(wt_ref[dy * 3 + dx], op,
                                    preferred_element_type=jnp.float32)
        return acc

    def zero_guards(sc):
        # Only the two (C, W+1) guard bands around the interior must be zero;
        # re-zeroed every step so megacore sharding of the batch axis is safe.
        zg = jnp.zeros((sc.shape[0], w + 1), sc.dtype)
        sc[:, l0 - (w + 1):l0] = zg
        sc[:, l0 + hw:l0 + hw + w + 1] = zg

    zero_guards(xp_sc)
    zero_guards(h1p_sc)

    # Interior writes are 128-aligned, lane-dense stores (l0 % 128 == 0).
    xp_sc[:, l0:l0 + hw] = x_ref[0]

    # conv1 + bn1 (folded) + relu; h1 never leaves VMEM.
    h1 = jnp.maximum(conv3x3(xp_sc, w1_ref) + b1_ref[...], 0.0)
    h1p_sc[:, l0:l0 + hw] = h1.astype(h1p_sc.dtype)

    # conv2 + bn2 (folded) + residual + relu.
    y = conv3x3(h1p_sc, w2_ref) + b2_ref[...]
    y = jnp.maximum(y + x_ref[0].astype(jnp.float32), 0.0)
    out_ref[0] = y.astype(out_ref.dtype)


# ---------------------------------------------------------------------------
# Wrapper: pallas_call plumbing
# ---------------------------------------------------------------------------
def resnet_block_forward(x_flat, params, *, h, w):
    """x_flat: (N, Cin, H*W) bf16 (flattened NCHW) -> (N, Cout, H*W) bf16."""
    n, cin, hw = x_flat.shape
    cmid = params["w1"].shape[1]
    cout = params["w2"].shape[1]
    assert hw == h * w and cin == cmid == cout

    l0 = pl.cdiv(w + 1, 128) * 128                  # aligned interior lane offset
    padw = pl.cdiv(l0 + hw + w + 1, 128) * 128      # padded scratch width

    kernel = functools.partial(_block_kernel, h=h, w=w, l0=l0)
    return pl.pallas_call(
        kernel,
        out_shape=jax.ShapeDtypeStruct((n, cout, hw), jnp.bfloat16),
        grid=(n,),
        in_specs=[
            pl.BlockSpec((1, cin, hw), lambda b: (b, 0, 0)),
            pl.BlockSpec((9, cmid, cin), lambda b: (0, 0, 0)),
            pl.BlockSpec((cmid, 1), lambda b: (0, 0)),
            pl.BlockSpec((9, cout, cmid), lambda b: (0, 0, 0)),
            pl.BlockSpec((cout, 1), lambda b: (0, 0)),
        ],
        out_specs=pl.BlockSpec((1, cout, hw), lambda b: (b, 0, 0)),
        scratch_shapes=[
            pltpu.VMEM((cin, padw), jnp.bfloat16),   # 1-row-padded input
            pltpu.VMEM((cmid, padw), jnp.bfloat16),  # 1-row-padded h1
        ],
        compiler_params=pltpu.CompilerParams(
            dimension_semantics=("parallel",)),
    )(x_flat, params["w1"], params["b1"], params["w2"], params["b2"])


# ---------------------------------------------------------------------------
# Block module (parameters initialized deterministically in-script)
# ---------------------------------------------------------------------------
class PallasBlock:
    """ResNet-18 basic block; eval-mode BatchNorm folded into the convs."""

    def __init__(self, in_planes, planes, stride, key):
        if stride != 1 or in_planes != planes:
            # See TODO(synk) notes at the top of the file.
            raise NotImplementedError(
                "only the runnable stride=1, in_planes==planes path exists")
        self.in_planes, self.planes, self.stride = in_planes, planes, stride
        k1, k2, k3, k4 = jax.random.split(key, 4)

        def conv_w(k, co, ci):
            # PyTorch Conv2d weight layout: (out, in, kh, kw)
            return 0.1 * jax.random.normal(k, (co, ci, 3, 3), jnp.float32)

        def bn(k, c):
            ka, kb, kc, kd = jax.random.split(k, 4)
            gamma = 1.0 + 0.1 * jax.random.normal(ka, (c,), jnp.float32)
            beta = 0.1 * jax.random.normal(kb, (c,), jnp.float32)
            mean = 0.1 * jax.random.normal(kc, (c,), jnp.float32)
            var = jax.random.uniform(kd, (c,), jnp.float32, 0.5, 1.5)
            scale = gamma / jnp.sqrt(var + EPS)
            return scale, beta - mean * scale

        def fold(wt, scale):
            # fold BN scale into out-channels; (out,in,kh,kw) -> (9, out, in)
            wf = wt * scale[:, None, None, None]
            wf = jnp.transpose(wf, (2, 3, 0, 1)).reshape(9, wt.shape[0], wt.shape[1])
            return wf.astype(jnp.bfloat16)

        w1 = conv_w(k1, planes, in_planes)
        s1, b1 = bn(k2, planes)
        w2 = conv_w(k3, planes, planes)
        s2, b2 = bn(k4, planes)
        self.params = {
            "w1": fold(w1, s1), "b1": b1.reshape(planes, 1),
            "w2": fold(w2, s2), "b2": b2.reshape(planes, 1),
        }

    def __call__(self, x_nchw):
        n, c, h, w = x_nchw.shape
        x = x_nchw.astype(jnp.bfloat16).reshape(n, c, h * w)   # free reshape
        y = resnet_block_forward(x, self.params, h=h, w=w)
        return y.reshape(n, self.planes, h, w)                  # bf16 NCHW


# ---------------------------------------------------------------------------
# Pure-JAX reference (same bf16 weights / activations, f32 accumulation)
# ---------------------------------------------------------------------------
def _ref_block(block, x_nchw):
    p = block.params
    xb = x_nchw.astype(jnp.bfloat16)

    def conv3(inp, w9):
        co, ci = w9.shape[1], w9.shape[2]
        wt = jnp.transpose(w9.reshape(3, 3, co, ci), (2, 3, 0, 1))   # OIHW
        return jax.lax.conv_general_dilated(
            inp, wt, (1, 1), ((1, 1), (1, 1)),
            dimension_numbers=("NCHW", "OIHW", "NCHW"),
            preferred_element_type=jnp.float32)

    z1 = conv3(xb, p["w1"]) + p["b1"].reshape(1, -1, 1, 1)
    h1 = jnp.maximum(z1, 0.0).astype(jnp.bfloat16)
    z2 = conv3(h1, p["w2"]) + p["b2"].reshape(1, -1, 1, 1)
    y = jnp.maximum(z2 + xb.astype(jnp.float32), 0.0)
    return y.astype(jnp.bfloat16)


if __name__ == "__main__":
    key = jax.random.PRNGKey(0)
    kx, kp = jax.random.split(key)

    in_planes = planes = 8
    n, h, w = 2, 16, 16
    stride = 1  # stride>1 shape-mismatches in the source module (see TODO)

    x = jax.random.normal(kx, (n, in_planes, h, w), jnp.float32)
    block = PallasBlock(in_planes, planes, stride, kp)

    y = jax.block_until_ready(block(x))
    y_ref = _ref_block(block, x)

    assert y.shape == (n, planes, h, w), y.shape
    max_err = float(jnp.max(jnp.abs(y.astype(jnp.float32) -
                                    y_ref.astype(jnp.float32))))
    assert max_err < 2e-2, max_err
    print("KERNEL_OK")
</pallas_src>

<mosaic_0001>
module attributes {stable_mosaic.version = 11 : i64} {
  func.func @_block_kernel(%arg0: i32, %arg1: memref<1x8x256xbf16, #tpu.memory_space<vmem>>, %arg2: memref<9x8x8xbf16, #tpu.memory_space<vmem>>, %arg3: memref<8x1xf32, #tpu.memory_space<vmem>>, %arg4: memref<9x8x8xbf16, #tpu.memory_space<vmem>>, %arg5: memref<8x1xf32, #tpu.memory_space<vmem>>, %arg6: memref<1x8x256xbf16, #tpu.memory_space<vmem>>, %arg7: memref<8x512xbf16, #tpu.memory_space<vmem>>, %arg8: memref<8x512xbf16, #tpu.memory_space<vmem>>) attributes {dimension_semantics = [#tpu.dimension_semantics<parallel>], iteration_bounds = array<i64: 2>, scalar_prefetch = 0 : i64, scratch_operands = 2 : i64, tpu.core_type = #tpu.core_type<tc>, window_params = [{transform_indices = @transform_0, window_bounds = array<i64: 1, 8, 256>}, {pipeline_mode = #tpu.pipeline_mode<synchronous>, transform_indices = @transform_1, window_bounds = array<i64: 9, 8, 8>}, {pipeline_mode = #tpu.pipeline_mode<synchronous>, transform_indices = @transform_2, window_bounds = array<i64: 8, 1>}, {pipeline_mode = #tpu.pipeline_mode<synchronous>, transform_indices = @transform_3, window_bounds = array<i64: 9, 8, 8>}, {pipeline_mode = #tpu.pipeline_mode<synchronous>, transform_indices = @transform_4, window_bounds = array<i64: 8, 1>}, {transform_indices = @transform_5, window_bounds = array<i64: 1, 8, 256>}]} {
    %0 = tpu.iota {dimensions = array<i32: 1>} : vector<8x256xi32>
    %c16_i32 = arith.constant 16 : i32
    %c0_i32 = arith.constant 0 : i32
    %1 = arith.cmpi eq, %c16_i32, %c0_i32 : i32
    %c1_i32 = arith.constant 1 : i32
    %2 = arith.select %1, %c1_i32, %c16_i32 : i32
    %3 = vector.broadcast %2 : i32 to vector<8x256xi32>
    %4 = arith.remsi %0, %3 : vector<8x256xi32>
    %c0_i32_0 = arith.constant 0 : i32
    %5 = vector.broadcast %c0_i32_0 : i32 to vector<8x256xi32>
    %6 = arith.cmpi ne, %4, %5 : vector<8x256xi32>
    %c0_i32_1 = arith.constant 0 : i32
    %7 = vector.broadcast %c0_i32_1 : i32 to vector<8x256xi32>
    %8 = arith.cmpi slt, %4, %7 : vector<8x256xi32>
    %c0_i32_2 = arith.constant 0 : i32
    %9 = arith.cmpi slt, %2, %c0_i32_2 : i32
    %10 = vector.broadcast %9 : i1 to vector<8x256xi1>
    %11 = vector.broadcast %10 : vector<8x256xi1> to vector<8x256xi1>
    %12 = arith.xori %8, %11 : vector<8x256xi1>
    %13 = arith.andi %12, %6 : vector<8x256xi1>
    %14 = vector.broadcast %2 : i32 to vector<8x256xi32>
    %15 = arith.addi %4, %14 : vector<8x256xi32>
    %16 = arith.select %13, %15, %4 : vector<8x256xi1>, vector<8x256xi32>
    %c0_i32_3 = arith.constant 0 : i32
    %17 = vector.broadcast %c0_i32_3 : i32 to vector<8x256xi32>
    %18 = arith.cmpi ne, %16, %17 : vector<8x256xi32>
    %c15_i32 = arith.constant 15 : i32
    %19 = vector.broadcast %c15_i32 : i32 to vector<8x256xi32>
    %20 = arith.cmpi ne, %16, %19 : vector<8x256xi32>
    %cst = arith.constant 0.000000e+00 : bf16
    %21 = vector.broadcast %cst : bf16 to vector<8x17xbf16>
    %c0 = arith.constant 0 : index
    %c111 = arith.constant 111 : index
    %22 = vector.load %arg7[%c0, %c111] : memref<8x512xbf16, #tpu.memory_space<vmem>>, vector<8x17xbf16>
    tpu.vector_store %arg7[%c0, %c111], %21 {strides = array<i32>} : memref<8x512xbf16, #tpu.memory_space<vmem>>, vector<8x17xbf16>,
    %c0_4 = arith.constant 0 : index
    %c384 = arith.constant 384 : index
    %23 = vector.load %arg7[%c0_4, %c384] : memref<8x512xbf16, #tpu.memory_space<vmem>>, vector<8x17xbf16>
    tpu.vector_store %arg7[%c0_4, %c384], %21 {strides = array<i32>} : memref<8x512xbf16, #tpu.memory_space<vmem>>, vector<8x17xbf16>,
    %cst_5 = arith.constant 0.000000e+00 : bf16
    %24 = vector.broadcast %cst_5 : bf16 to vector<8x17xbf16>
    %c0_6 = arith.constant 0 : index
    %c111_7 = arith.constant 111 : index
    %25 = vector.load %arg8[%c0_6, %c111_7] : memref<8x512xbf16, #tpu.memory_space<vmem>>, vector<8x17xbf16>
    tpu.vector_store %arg8[%c0_6, %c111_7], %24 {strides = array<i32>} : memref<8x512xbf16, #tpu.memory_space<vmem>>, vector<8x17xbf16>,
    %c0_8 = arith.constant 0 : index
    %c384_9 = arith.constant 384 : index
    %26 = vector.load %arg8[%c0_8, %c384_9] : memref<8x512xbf16, #tpu.memory_space<vmem>>, vector<8x17xbf16>
    tpu.vector_store %arg8[%c0_8, %c384_9], %24 {strides = array<i32>} : memref<8x512xbf16, #tpu.memory_space<vmem>>, vector<8x17xbf16>,
    %c0_10 = arith.constant 0 : index
    %c0_11 = arith.constant 0 : index
    %c0_12 = arith.constant 0 : index
    %27 = vector.load %arg1[%c0_10, %c0_11, %c0_12] : memref<1x8x256xbf16, #tpu.memory_space<vmem>>, vector<1x8x256xbf16>
    %28 = vector.shape_cast %27 : vector<1x8x256xbf16> to vector<8x256xbf16>
    %c0_13 = arith.constant 0 : index
    %c128 = arith.constant 128 : index
    %29 = vector.load %arg7[%c0_13, %c128] : memref<8x512xbf16, #tpu.memory_space<vmem>>, vector<8x256xbf16>
    tpu.vector_store %arg7[%c0_13, %c128], %28 {strides = array<i32>} : memref<8x512xbf16, #tpu.memory_space<vmem>>, vector<8x256xbf16>,
    %cst_14 = arith.constant 0.000000e+00 : bf16
    %30 = vector.broadcast %cst_14 : bf16 to vector<8x256xbf16>
    %cst_15 = arith.constant 0.000000e+00 : f32
    %31 = vector.broadcast %cst_15 : f32 to vector<8x256xf32>
    %c0_16 = arith.constant 0 : index
    %c111_17 = arith.constant 111 : index
    %32 = vector.load %arg7[%c0_16, %c111_17] : memref<8x512xbf16, #tpu.memory_space<vmem>>, vector<8x256xbf16>
    %33 = arith.select %18, %32, %30 : vector<8x256xi1>, vector<8x256xbf16>
    %c0_18 = arith.constant 0 : index
    %c0_19 = arith.constant 0 : index
    %c0_20 = arith.constant 0 : index
    %34 = vector.load %arg2[%c0_18, %c0_19, %c0_20] : memref<9x8x8xbf16, #tpu.memory_space<vmem>>, vector<1x8x8xbf16>
    %35 = vector.shape_cast %34 : vector<1x8x8xbf16> to vector<8x8xbf16>
    %cst_21 = arith.constant dense<0.000000e+00> : vector<8x256xf32>
    %36 = tpu.matmul %35, %33, %cst_21 {dimension_numbers = #tpu.dot_dimension_numbers<[1], [0], [0], [1], [0, 0, 1, 1], [], []>} : vector<8x8xbf16>, vector<8x256xbf16>, vector<8x256xf32> -> vector<8x256xf32>
    %37 = arith.addf %31, %36 : vector<8x256xf32>
    %c0_22 = arith.constant 0 : index
    %c112 = arith.constant 112 : index
    %38 = vector.load %arg7[%c0_22, %c112] : memref<8x512xbf16, #tpu.memory_space<vmem>>, vector<8x256xbf16>
    %c1 = arith.constant 1 : index
    %c0_23 = arith.constant 0 : index
    %c0_24 = arith.constant 0 : index
    %39 = vector.load %arg2[%c1, %c0_23, %c0_24] : memref<9x8x8xbf16, #tpu.memory_space<vmem>>, vector<1x8x8xbf16>
    %40 = vector.shape_cast %39 : vector<1x8x8xbf16> to vector<8x8xbf16>
    %cst_25 = arith.constant dense<0.000000e+00> : vector<8x256xf32>
    %41 = tpu.matmul %40, %38, %cst_25 {dimension_numbers = #tpu.dot_dimension_numbers<[1], [0], [0], [1], [0, 0, 1, 1], [], []>} : vector<8x8xbf16>, vector<8x256xbf16>, vector<8x256xf32> -> vector<8x256xf32>
    %42 = arith.addf %37, %41 : vector<8x256xf32>
    %c0_26 = arith.constant 0 : index
    %c113 = arith.constant 113 : index
    %43 = vector.load %arg7[%c0_26, %c113] : memref<8x512xbf16, #tpu.memory_space<vmem>>, vector<8x256xbf16>
    %44 = arith.select %20, %43, %30 : vector<8x256xi1>, vector<8x256xbf16>
    %c2 = arith.constant 2 : index
    %c0_27 = arith.constant 0 : index
    %c0_28 = arith.constant 0 : index
    %45 = vector.load %arg2[%c2, %c0_27, %c0_28] : memref<9x8x8xbf16, #tpu.memory_space<vmem>>, vector<1x8x8xbf16>
    %46 = vector.shape_cast %45 : vector<1x8x8xbf16> to vector<8x8xbf16>
    %cst_29 = arith.constant dense<0.000000e+00> : vector<8x256xf32>
    %47 = tpu.matmul %46, %44, %cst_29 {dimension_numbers = #tpu.dot_dimension_numbers<[1], [0], [0], [1], [0, 0, 1, 1], [], []>} : vector<8x8xbf16>, vector<8x256xbf16>, vector<8x256xf32> -> vector<8x256xf32>
    %48 = arith.addf %42, %47 : vector<8x256xf32>
    %c0_30 = arith.constant 0 : index
    %c127 = arith.constant 127 : index
    %49 = vector.load %arg7[%c0_30, %c127] : memref<8x512xbf16, #tpu.memory_space<vmem>>, vector<8x256xbf16>
    %50 = arith.select %18, %49, %30 : vector<8x256xi1>, vector<8x256xbf16>
    %c3 = arith.constant 3 : index
    %c0_31 = arith.constant 0 : index
    %c0_32 = arith.constant 0 : index
    %51 = vector.load %arg2[%c3, %c0_31, %c0_32] : memref<9x8x8xbf16, #tpu.memory_space<vmem>>, vector<1x8x8xbf16>
    %52 = vector.shape_cast %51 : vector<1x8x8xbf16> to vector<8x8xbf16>
    %cst_33 = arith.constant dense<0.000000e+00> : vector<8x256xf32>
    %53 = tpu.matmul %52, %50, %cst_33 {dimension_numbers = #tpu.dot_dimension_numbers<[1], [0], [0], [1], [0, 0, 1, 1], [], []>} : vector<8x8xbf16>, vector<8x256xbf16>, vector<8x256xf32> -> vector<8x256xf32>
    %54 = arith.addf %48, %53 : vector<8x256xf32>
    %c0_34 = arith.constant 0 : index
    %c128_35 = arith.constant 128 : index
    %55 = vector.load %arg7[%c0_34, %c128_35] : memref<8x512xbf16, #tpu.memory_space<vmem>>, vector<8x256xbf16>
    %c4 = arith.constant 4 : index
    %c0_36 = arith.constant 0 : index
    %c0_37 = arith.constant 0 : index
    %56 = vector.load %arg2[%c4, %c0_36, %c0_37] : memref<9x8x8xbf16, #tpu.memory_space<vmem>>, vector<1x8x8xbf16>
    %57 = vector.shape_cast %56 : vector<1x8x8xbf16> to vector<8x8xbf16>
    %cst_38 = arith.constant dense<0.000000e+00> : vector<8x256xf32>
    %58 = tpu.matmul %57, %55, %cst_38 {dimension_numbers = #tpu.dot_dimension_numbers<[1], [0], [0], [1], [0, 0, 1, 1], [], []>} : vector<8x8xbf16>, vector<8x256xbf16>, vector<8x256xf32> -> vector<8x256xf32>
    %59 = arith.addf %54, %58 : vector<8x256xf32>
    %c0_39 = arith.constant 0 : index
    %c129 = arith.constant 129 : index
    %60 = vector.load %arg7[%c0_39, %c129] : memref<8x512xbf16, #tpu.memory_space<vmem>>, vector<8x256xbf16>
    %61 = arith.select %20, %60, %30 : vector<8x256xi1>, vector<8x256xbf16>
    %c5 = arith.constant 5 : index
    %c0_40 = arith.constant 0 : index
    %c0_41 = arith.constant 0 : index
    %62 = vector.load %arg2[%c5, %c0_40, %c0_41] : memref<9x8x8xbf16, #tpu.memory_space<vmem>>, vector<1x8x8xbf16>
    %63 = vector.shape_cast %62 : vector<1x8x8xbf16> to vector<8x8xbf16>
    %cst_42 = arith.constant dense<0.000000e+00> : vector<8x256xf32>
    %64 = tpu.matmul %63, %61, %cst_42 {dimension_numbers = #tpu.dot_dimension_numbers<[1], [0], [0], [1], [0, 0, 1, 1], [], []>} : vector<8x8xbf16>, vector<8x256xbf16>, vector<8x256xf32> -> vector<8x256xf32>
    %65 = arith.addf %59, %64 : vector<8x256xf32>
    %c0_43 = arith.constant 0 : index
    %c143 = arith.constant 143 : index
    %66 = vector.load %arg7[%c0_43, %c143] : memref<8x512xbf16, #tpu.memory_space<vmem>>, vector<8x256xbf16>
    %67 = arith.select %18, %66, %30 : vector<8x256xi1>, vector<8x256xbf16>
    %c6 = arith.constant 6 : index
    %c0_44 = arith.constant 0 : index
    %c0_45 = arith.constant 0 : index
    %68 = vector.load %arg2[%c6, %c0_44, %c0_45] : memref<9x8x8xbf16, #tpu.memory_space<vmem>>, vector<1x8x8xbf16>
    %69 = vector.shape_cast %68 : vector<1x8x8xbf16> to vector<8x8xbf16>
    %cst_46 = arith.constant dense<0.000000e+00> : vector<8x256xf32>
    %70 = tpu.matmul %69, %67, %cst_46 {dimension_numbers = #tpu.dot_dimension_numbers<[1], [0], [0], [1], [0, 0, 1, 1], [], []>} : vector<8x8xbf16>, vector<8x256xbf16>, vector<8x256xf32> -> vector<8x256xf32>
    %71 = arith.addf %65, %70 : vector<8x256xf32>
    %c0_47 = arith.constant 0 : index
    %c144 = arith.constant 144 : index
    %72 = vector.load %arg7[%c0_47, %c144] : memref<8x512xbf16, #tpu.memory_space<vmem>>, vector<8x256xbf16>
    %c7 = arith.constant 7 : index
    %c0_48 = arith.constant 0 : index
    %c0_49 = arith.constant 0 : index
    %73 = vector.load %arg2[%c7, %c0_48, %c0_49] : memref<9x8x8xbf16, #tpu.memory_space<vmem>>, vector<1x8x8xbf16>
    %74 = vector.shape_cast %73 : vector<1x8x8xbf16> to vector<8x8xbf16>
    %cst_50 = arith.constant dense<0.000000e+00> : vector<8x256xf32>
    %75 = tpu.matmul %74, %72, %cst_50 {dimension_numbers = #tpu.dot_dimension_numbers<[1], [0], [0], [1], [0, 0, 1, 1], [], []>} : vector<8x8xbf16>, vector<8x256xbf16>, vector<8x256xf32> -> vector<8x256xf32>
    %76 = arith.addf %71, %75 : vector<8x256xf32>
    %c0_51 = arith.constant 0 : index
    %c145 = arith.constant 145 : index
    %77 = vector.load %arg7[%c0_51, %c145] : memref<8x512xbf16, #tpu.memory_space<vmem>>, vector<8x256xbf16>
    %78 = arith.select %20, %77, %30 : vector<8x256xi1>, vector<8x256xbf16>
    %c8 = arith.constant 8 : index
    %c0_52 = arith.constant 0 : index
    %c0_53 = arith.constant 0 : index
    %79 = vector.load %arg2[%c8, %c0_52, %c0_53] : memref<9x8x8xbf16, #tpu.memory_space<vmem>>, vector<1x8x8xbf16>
    %80 = vector.shape_cast %79 : vector<1x8x8xbf16> to vector<8x8xbf16>
    %cst_54 = arith.constant dense<0.000000e+00> : vector<8x256xf32>
    %81 = tpu.matmul %80, %78, %cst_54 {dimension_numbers = #tpu.dot_dimension_numbers<[1], [0], [0], [1], [0, 0, 1, 1], [], []>} : vector<8x8xbf16>, vector<8x256xbf16>, vector<8x256xf32> -> vector<8x256xf32>
    %82 = arith.addf %76, %81 : vector<8x256xf32>
    %c0_55 = arith.constant 0 : index
    %c0_56 = arith.constant 0 : index
    %83 = vector.load %arg3[%c0_55, %c0_56] : memref<8x1xf32, #tpu.memory_space<vmem>>, vector<8x1xf32>
    %84 = vector.broadcast %83 : vector<8x1xf32> to vector<8x256xf32>
    %85 = arith.addf %82, %84 : vector<8x256xf32>
    %cst_57 = arith.constant 0.000000e+00 : f32
    %86 = vector.broadcast %cst_57 : f32 to vector<8x256xf32>
    %87 = arith.maximumf %85, %86 : vector<8x256xf32>
    %88 = arith.truncf %87 : vector<8x256xf32> to vector<8x256xbf16>
    %c0_58 = arith.constant 0 : index
    %c128_59 = arith.constant 128 : index
    %89 = vector.load %arg8[%c0_58, %c128_59] : memref<8x512xbf16, #tpu.memory_space<vmem>>, vector<8x256xbf16>
    tpu.vector_store %arg8[%c0_58, %c128_59], %88 {strides = array<i32>} : memref<8x512xbf16, #tpu.memory_space<vmem>>, vector<8x256xbf16>,
    %cst_60 = arith.constant 0.000000e+00 : bf16
    %90 = vector.broadcast %cst_60 : bf16 to vector<8x256xbf16>
    %cst_61 = arith.constant 0.000000e+00 : f32
    %91 = vector.broadcast %cst_61 : f32 to vector<8x256xf32>
    %c0_62 = arith.constant 0 : index
    %c111_63 = arith.constant 111 : index
    %92 = vector.load %arg8[%c0_62, %c111_63] : memref<8x512xbf16, #tpu.memory_space<vmem>>, vector<8x256xbf16>
    %93 = arith.select %18, %92, %90 : vector<8x256xi1>, vector<8x256xbf16>
    %c0_64 = arith.constant 0 : index
    %c0_65 = arith.constant 0 : index
    %c0_66 = arith.constant 0 : index
    %94 = vector.load %arg4[%c0_64, %c0_65, %c0_66] : memref<9x8x8xbf16, #tpu.memory_space<vmem>>, vector<1x8x8xbf16>
    %95 = vector.shape_cast %94 : vector<1x8x8xbf16> to vector<8x8xbf16>
    %cst_67 = arith.constant dense<0.000000e+00> : vector<8x256xf32>
    %96 = tpu.matmul %95, %93, %cst_67 {dimension_numbers = #tpu.dot_dimension_numbers<[1], [0], [0], [1], [0, 0, 1, 1], [], []>} : vector<8x8xbf16>, vector<8x256xbf16>, vector<8x256xf32> -> vector<8x256xf32>
    %97 = arith.addf %91, %96 : vector<8x256xf32>
    %c0_68 = arith.constant 0 : index
    %c112_69 = arith.constant 112 : index
    %98 = vector.load %arg8[%c0_68, %c112_69] : memref<8x512xbf16, #tpu.memory_space<vmem>>, vector<8x256xbf16>
    %c1_70 = arith.constant 1 : index
    %c0_71 = arith.constant 0 : index
    %c0_72 = arith.constant 0 : index
    %99 = vector.load %arg4[%c1_70, %c0_71, %c0_72] : memref<9x8x8xbf16, #tpu.memory_space<vmem>>, vector<1x8x8xbf16>
    %100 = vector.shape_cast %99 : vector<1x8x8xbf16> to vector<8x8xbf16>
    %cst_73 = arith.constant dense<0.000000e+00> : vector<8x256xf32>
    %101 = tpu.matmul %100, %98, %cst_73 {dimension_numbers = #tpu.dot_dimension_numbers<[1], [0], [0], [1], [0, 0, 1, 1], [], []>} : vector<8x8xbf16>, vector<8x256xbf16>, vector<8x256xf32> -> vector<8x256xf32>
    %102 = arith.addf %97, %101 : vector<8x256xf32>
    %c0_74 = arith.constant 0 : index
    %c113_75 = arith.constant 113 : index
    %103 = vector.load %arg8[%c0_74, %c113_75] : memref<8x512xbf16, #tpu.memory_space<vmem>>, vector<8x256xbf16>
    %104 = arith.select %20, %103, %90 : vector<8x256xi1>, vector<8x256xbf16>
    %c2_76 = arith.constant 2 : index
    %c0_77 = arith.constant 0 : index
    %c0_78 = arith.constant 0 : index
    %105 = vector.load %arg4[%c2_76, %c0_77, %c0_78] : memref<9x8x8xbf16, #tpu.memory_space<vmem>>, vector<1x8x8xbf16>
    %106 = vector.shape_cast %105 : vector<1x8x8xbf16> to vector<8x8xbf16>
    %cst_79 = arith.constant dense<0.000000e+00> : vector<8x256xf32>
    %107 = tpu.matmul %106, %104, %cst_79 {dimension_numbers = #tpu.dot_dimension_numbers<[1], [0], [0], [1], [0, 0, 1, 1], [], []>} : vector<8x8xbf16>, vector<8x256xbf16>, vector<8x256xf32> -> vector<8x256xf32>
    %108 = arith.addf %102, %107 : vector<8x256xf32>
    %c0_80 = arith.constant 0 : index
    %c127_81 = arith.constant 127 : index
    %109 = vector.load %arg8[%c0_80, %c127_81] : memref<8x512xbf16, #tpu.memory_space<vmem>>, vector<8x256xbf16>
    %110 = arith.select %18, %109, %90 : vector<8x256xi1>, vector<8x256xbf16>
    %c3_82 = arith.constant 3 : index
    %c0_83 = arith.constant 0 : index
    %c0_84 = arith.constant 0 : index
    %111 = vector.load %arg4[%c3_82, %c0_83, %c0_84] : memref<9x8x8xbf16, #tpu.memory_space<vmem>>, vector<1x8x8xbf16>
    %112 = vector.shape_cast %111 : vector<1x8x8xbf16> to vector<8x8xbf16>
    %cst_85 = arith.constant dense<0.000000e+00> : vector<8x256xf32>
    %113 = tpu.matmul %112, %110, %cst_85 {dimension_numbers = #tpu.dot_dimension_numbers<[1], [0], [0], [1], [0, 0, 1, 1], [], []>} : vector<8x8xbf16>, vector<8x256xbf16>, vector<8x256xf32> -> vector<8x256xf32>
    %114 = arith.addf %108, %113 : vector<8x256xf32>
    %c0_86 = arith.constant 0 : index
    %c128_87 = arith.constant 128 : index
    %115 = vector.load %arg8[%c0_86, %c128_87] : memref<8x512xbf16, #tpu.memory_space<vmem>>, vector<8x256xbf16>
    %c4_88 = arith.constant 4 : index
    %c0_89 = arith.constant 0 : index
    %c0_90 = arith.constant 0 : index
    %116 = vector.load %arg4[%c4_88, %c0_89, %c0_90] : memref<9x8x8xbf16, #tpu.memory_space<vmem>>, vector<1x8x8xbf16>
    %117 = vector.shape_cast %116 : vector<1x8x8xbf16> to vector<8x8xbf16>
    %cst_91 = arith.constant dense<0.000000e+00> : vector<8x256xf32>
    %118 = tpu.matmul %117, %115, %cst_91 {dimension_numbers = #tpu.dot_dimension_numbers<[1], [0], [0], [1], [0, 0, 1, 1], [], []>} : vector<8x8xbf16>, vector<8x256xbf16>, vector<8x256xf32> -> vector<8x256xf32>
    %119 = arith.addf %114, %118 : vector<8x256xf32>
    %c0_92 = arith.constant 0 : index
    %c129_93 = arith.constant 129 : index
    %120 = vector.load %arg8[%c0_92, %c129_93] : memref<8x512xbf16, #tpu.memory_space<vmem>>, vector<8x256xbf16>
    %121 = arith.select %20, %120, %90 : vector<8x256xi1>, vector<8x256xbf16>
    %c5_94 = arith.constant 5 : index
    %c0_95 = arith.constant 0 : index
    %c0_96 = arith.constant 0 : index
    %122 = vector.load %arg4[%c5_94, %c0_95, %c0_96] : memref<9x8x8xbf16, #tpu.memory_space<vmem>>, vector<1x8x8xbf16>
    %123 = vector.shape_cast %122 : vector<1x8x8xbf16> to vector<8x8xbf16>
    %cst_97 = arith.constant dense<0.000000e+00> : vector<8x256xf32>
    %124 = tpu.matmul %123, %121, %cst_97 {dimension_numbers = #tpu.dot_dimension_numbers<[1], [0], [0], [1], [0, 0, 1, 1], [], []>} : vector<8x8xbf16>, vector<8x256xbf16>, vector<8x256xf32> -> vector<8x256xf32>
    %125 = arith.addf %119, %124 : vector<8x256xf32>
    %c0_98 = arith.constant 0 : index
    %c143_99 = arith.constant 143 : index
    %126 = vector.load %arg8[%c0_98, %c143_99] : memref<8x512xbf16, #tpu.memory_space<vmem>>, vector<8x256xbf16>
    %127 = arith.select %18, %126, %90 : vector<8x256xi1>, vector<8x256xbf16>
    %c6_100 = arith.constant 6 : index
    %c0_101 = arith.constant 0 : index
    %c0_102 = arith.constant 0 : index
    %128 = vector.load %arg4[%c6_100, %c0_101, %c0_102] : memref<9x8x8xbf16, #tpu.memory_space<vmem>>, vector<1x8x8xbf16>
    %129 = vector.shape_cast %128 : vector<1x8x8xbf16> to vector<8x8xbf16>
    %cst_103 = arith.constant dense<0.000000e+00> : vector<8x256xf32>
    %130 = tpu.matmul %129, %127, %cst_103 {dimension_numbers = #tpu.dot_dimension_numbers<[1], [0], [0], [1], [0, 0, 1, 1], [], []>} : vector<8x8xbf16>, vector<8x256xbf16>, vector<8x256xf32> -> vector<8x256xf32>
    %131 = arith.addf %125, %130 : vector<8x256xf32>
    %c0_104 = arith.constant 0 : index
    %c144_105 = arith.constant 144 : index
    %132 = vector.load %arg8[%c0_104, %c144_105] : memref<8x512xbf16, #tpu.memory_space<vmem>>, vector<8x256xbf16>
    %c7_106 = arith.constant 7 : index
    %c0_107 = arith.constant 0 : index
    %c0_108 = arith.constant 0 : index
    %133 = vector.load %arg4[%c7_106, %c0_107, %c0_108] : memref<9x8x8xbf16, #tpu.memory_space<vmem>>, vector<1x8x8xbf16>
    %134 = vector.shape_cast %133 : vector<1x8x8xbf16> to vector<8x8xbf16>
    %cst_109 = arith.constant dense<0.000000e+00> : vector<8x256xf32>
    %135 = tpu.matmul %134, %132, %cst_109 {dimension_numbers = #tpu.dot_dimension_numbers<[1], [0], [0], [1], [0, 0, 1, 1], [], []>} : vector<8x8xbf16>, vector<8x256xbf16>, vector<8x256xf32> -> vector<8x256xf32>
    %136 = arith.addf %131, %135 : vector<8x256xf32>
    %c0_110 = arith.constant 0 : index
    %c145_111 = arith.constant 145 : index
    %137 = vector.load %arg8[%c0_110, %c145_111] : memref<8x512xbf16, #tpu.memory_space<vmem>>, vector<8x256xbf16>
    %138 = arith.select %20, %137, %90 : vector<8x256xi1>, vector<8x256xbf16>
    %c8_112 = arith.constant 8 : index
    %c0_113 = arith.constant 0 : index
    %c0_114 = arith.constant 0 : index
    %139 = vector.load %arg4[%c8_112, %c0_113, %c0_114] : memref<9x8x8xbf16, #tpu.memory_space<vmem>>, vector<1x8x8xbf16>
    %140 = vector.shape_cast %139 : vector<1x8x8xbf16> to vector<8x8xbf16>
    %cst_115 = arith.constant dense<0.000000e+00> : vector<8x256xf32>
    %141 = tpu.matmul %140, %138, %cst_115 {dimension_numbers = #tpu.dot_dimension_numbers<[1], [0], [0], [1], [0, 0, 1, 1], [], []>} : vector<8x8xbf16>, vector<8x256xbf16>, vector<8x256xf32> -> vector<8x256xf32>
    %142 = arith.addf %136, %141 : vector<8x256xf32>
    %c0_116 = arith.constant 0 : index
    %c0_117 = arith.constant 0 : index
    %143 = vector.load %arg5[%c0_116, %c0_117] : memref<8x1xf32, #tpu.memory_space<vmem>>, vector<8x1xf32>
    %144 = vector.broadcast %143 : vector<8x1xf32> to vector<8x256xf32>
    %145 = arith.addf %142, %144 : vector<8x256xf32>
    %c0_118 = arith.constant 0 : index
    %c0_119 = arith.constant 0 : index
    %c0_120 = arith.constant 0 : index
    %146 = vector.load %arg1[%c0_118, %c0_119, %c0_120] : memref<1x8x256xbf16, #tpu.memory_space<vmem>>, vector<1x8x256xbf16>
    %147 = vector.shape_cast %146 : vector<1x8x256xbf16> to vector<8x256xbf16>
    %148 = arith.extf %147 : vector<8x256xbf16> to vector<8x256xf32>
    %149 = arith.addf %145, %148 : vector<8x256xf32>
    %cst_121 = arith.constant 0.000000e+00 : f32
    %150 = vector.broadcast %cst_121 : f32 to vector<8x256xf32>
    %151 = arith.maximumf %149, %150 : vector<8x256xf32>
    %152 = arith.truncf %151 : vector<8x256xf32> to vector<8x256xbf16>
    %c0_122 = arith.constant 0 : index
    %c0_123 = arith.constant 0 : index
    %c0_124 = arith.constant 0 : index
    %153 = vector.load %arg6[%c0_122, %c0_123, %c0_124] : memref<1x8x256xbf16, #tpu.memory_space<vmem>>, vector<1x8x256xbf16>
    %154 = vector.shape_cast %153 : vector<1x8x256xbf16> to vector<8x256xbf16>
    %155 = vector.shape_cast %152 : vector<8x256xbf16> to vector<1x8x256xbf16>
    tpu.vector_store %arg6[%c0_122, %c0_123, %c0_124], %155 {strides = array<i32>} : memref<1x8x256xbf16, #tpu.memory_space<vmem>>, vector<1x8x256xbf16>,
    return
  }
  func.func @transform_0(%arg0: i32) -> (i32, i32, i32) {
    %c0_i32 = arith.constant 0 : i32
    %c0_i32_0 = arith.constant 0 : i32
    %c0_i32_1 = arith.constant 0 : i32
    return %arg0, %c0_i32, %c0_i32_0 : i32, i32, i32
  }
  func.func @transform_1(%arg0: i32) -> (i32, i32, i32) {
    %c0_i32 = arith.constant 0 : i32
    %c0_i32_0 = arith.constant 0 : i32
    %c0_i32_1 = arith.constant 0 : i32
    %c0_i32_2 = arith.constant 0 : i32
    return %c0_i32, %c0_i32_0, %c0_i32_1 : i32, i32, i32
  }
  func.func @transform_2(%arg0: i32) -> (i32, i32) {
    %c0_i32 = arith.constant 0 : i32
    %c0_i32_0 = arith.constant 0 : i32
    %c0_i32_1 = arith.constant 0 : i32
    return %c0_i32, %c0_i32_0 : i32, i32
  }
  func.func @transform_3(%arg0: i32) -> (i32, i32, i32) {
    %c0_i32 = arith.constant 0 : i32
    %c0_i32_0 = arith.constant 0 : i32
    %c0_i32_1 = arith.constant 0 : i32
    %c0_i32_2 = arith.constant 0 : i32
    return %c0_i32, %c0_i32_0, %c0_i32_1 : i32, i32, i32
  }
  func.func @transform_4(%arg0: i32) -> (i32, i32) {
    %c0_i32 = arith.constant 0 : i32
    %c0_i32_0 = arith.constant 0 : i32
    %c0_i32_1 = arith.constant 0 : i32
    return %c0_i32, %c0_i32_0 : i32, i32
  }
  func.func @transform_5(%arg0: i32) -> (i32, i32, i32) {
    %c0_i32 = arith.constant 0 : i32
    %c0_i32_0 = arith.constant 0 : i32
    %c0_i32_1 = arith.constant 0 : i32
    return %arg0, %c0_i32, %c0_i32_0 : i32, i32, i32
  }
}

</mosaic_0001>

<llo_original>
// kernel: tpu_custom_call.1
$region0: #{tpu_custom_call.1}
  #allocation0 [shape = 'u32[]', space=smem, size = 0x4, offset = 0x4, fixed_abs, tag = 'smem constant byte address 0x4 - core index']
  #allocation1 [shape = 'u32[144,128]{1,0:T(1,128)}', space=vmem, size = 0x12000, scoped, tag = 'internal scratch']
  #allocation2 [shape = 'bf16[8,512]{1,0:T(8,128)(2,1)}', space=vmem, size = 0x2000, scoped, tag = 'scratch operand']
  #allocation3 [shape = 'bf16[8,512]{1,0:T(8,128)(2,1)}', space=vmem, size = 0x2000, scoped, tag = 'scratch operand']
  %s0 = inlined_call_operand.vmem [shape: bf16[2,8,256], index: 0, kind: input, shape index: {}]
  %s1 = inlined_call_operand.vmem [shape: bf16[9,8,8], index: 1, kind: input, shape index: {}]
  %s2 = inlined_call_operand.vmem [shape: f32[8,1], index: 2, kind: input, shape index: {}]
  %s3 = inlined_call_operand.vmem [shape: bf16[9,8,8], index: 3, kind: input, shape index: {}]
  %s4 = inlined_call_operand.vmem [shape: f32[8,1], index: 4, kind: input, shape index: {}]
  %s5 = inlined_call_operand.hbm [shape: bf16[2,8,256], index: 5, kind: output, shape index: {}]
  %s6 = sld [smem:[#allocation0]]
  $region53: #{tpu_custom_call.1} parent=0
    _
  %s8 = ssub.s32 1, %s6
  %s9 = scalar_select 0, %s8, %s6
  $region1: #{tpu_custom_call.1} parent=0
    #allocation4 [shape = 'u8[8192]{0}', space=vmem, size = 0x2000, scoped, tag = 'output window, operand 0']
    #allocation5 [shape = 's32[2]{0}', space=sflag, size = 0x8, scoped, tag = 'scoped memory for tpu_custom_call.1']
    %10 = vsyncpa [#allocation5], 0
    %s11 = scalar_lea.sflag [#allocation5], 1
    %12 = vsyncpa %s11, 0
    loop: start=0, step=1, limit=4
    $region2: #{tpu_custom_call.1} parent=1 // loop_pre_header
      _
    $region3: #{tpu_custom_call.1} parent=1 // loop_header
      %s14 = sphi 0, %s18
      %p15 = scmp.ge.s32.totalorder %s14, 4
      %s24 = sphi 0, %s26
      %s27 = sphi 0, %s24
      %s28 = sphi 0, %s27
      %s44 = sphi 0, %s28
      %s48 = sphi 0, %s48
      %s50 = sphi 0, %s48
      %s51 = sphi 0, %s50
      %s65 = sphi 0, %s51
      %s69 = sphi 0, %s69
      %s71 = sphi 0, %s69
      %s72 = sphi 0, %s71
      %s86 = sphi 0, %s72
      %s90 = sphi 0, %s90
      %s92 = sphi 0, %s90
      %s93 = sphi 0, %s92
      %s107 = sphi 0, %s93
      %s111 = sphi 0, %s111
      %s113 = sphi 0, %s111
      %s114 = sphi 0, %s113
      %s128 = sphi 0, %s114
      %s134 = sphi 0, %s136
      %s137 = sphi 0, %s134
      %s138 = sphi 0, %s137
      %s154 = sphi 0, %s138
    $region4: #{tpu_custom_call.1} parent=1 // loop_header_branch
      %17 = sbr.rel (%p15) target = $region8
    $region5: #{tpu_custom_call.1} parent=1 // loop_body
      %s19 = ssub.s32 %s14, 1
      %s20 = ssub.s32 %s14, 2
      %s21 = sadd.s32 %s14, 1
      %s22 = ssub.s32 %s14, %s21
      %p23 = scmp.eq.s32.totalorder %s22, 0
      %s25 = sadd.s32 %s24, 1
      %s26 = scalar_select %p23, %s24, %s25
      %p29 = pneg %p23
      %p30 = scmp.eq.s32.totalorder %s14, 1
      %p31 = por %p29, %p30
      %p32 = scmp.ne.s32.totalorder %s24, %s27
      %p33 = scmp.eq.s32.totalorder %s14, 0
      %p34 = por %p32, %p33
      %p35 = scmp.ne.s32.totalorder %s24, %s27
      %p36 = scmp.eq.s32.totalorder %s19, 1
      %p37 = por %p35, %p36
      %p38 = scmp.ne.s32.totalorder %s27, %s28
      %p39 = scmp.eq.s32.totalorder %s19, 0
      %p40 = por %p38, %p39
      %p41 = scmp.ne.s32.totalorder %s27, %s28
      %p42 = scmp.eq.s32.totalorder %s20, 1
      %p43 = por %p41, %p42
      %p45 = scmp.ne.s32.totalorder %s28, %s44
      %p46 = scmp.eq.s32.totalorder %s20, 0
      %p47 = por %p45, %p46
      %s49 = sadd.s32 %s48, 1
      %p52 = scmp.eq.s32.totalorder %s14, 1
      %p53 = scmp.ne.s32.totalorder %s48, %s50
      %p54 = scmp.eq.s32.totalorder %s14, 0
      %p55 = por %p53, %p54
      %p56 = scmp.ne.s32.totalorder %s48, %s50
      %p57 = scmp.eq.s32.totalorder %s19, 1
      %p58 = por %p56, %p57
      %p59 = scmp.ne.s32.totalorder %s50, %s51
      %p60 = scmp.eq.s32.totalorder %s19, 0
      %p61 = por %p59, %p60
      %p62 = scmp.ne.s32.totalorder %s50, %s51
      %p63 = scmp.eq.s32.totalorder %s20, 1
      %p64 = por %p62, %p63
      %p66 = scmp.ne.s32.totalorder %s51, %s65
      %p67 = scmp.eq.s32.totalorder %s20, 0
      %p68 = por %p66, %p67
      %s70 = sadd.s32 %s69, 1
      %p73 = scmp.eq.s32.totalorder %s14, 1
      %p74 = scmp.ne.s32.totalorder %s69, %s71
      %p75 = scmp.eq.s32.totalorder %s14, 0
      %p76 = por %p74, %p75
      %p77 = scmp.ne.s32.totalorder %s69, %s71
      %p78 = scmp.eq.s32.totalorder %s19, 1
      %p79 = por %p77, %p78
      %p80 = scmp.ne.s32.totalorder %s71, %s72
      %p81 = scmp.eq.s32.totalorder %s19, 0
      %p82 = por %p80, %p81
      %p83 = scmp.ne.s32.totalorder %s71, %s72
      %p84 = scmp.eq.s32.totalorder %s20, 1
      %p85 = por %p83, %p84
      %p87 = scmp.ne.s32.totalorder %s72, %s86
      %p88 = scmp.eq.s32.totalorder %s20, 0
      %p89 = por %p87, %p88
      %s91 = sadd.s32 %s90, 1
      %p94 = scmp.eq.s32.totalorder %s14, 1
      %p95 = scmp.ne.s32.totalorder %s90, %s92
      %p96 = scmp.eq.s32.totalorder %s14, 0
      %p97 = por %p95, %p96
      %p98 = scmp.ne.s32.totalorder %s90, %s92
      %p99 = scmp.eq.s32.totalorder %s19, 1
      %p100 = por %p98, %p99
      %p101 = scmp.ne.s32.totalorder %s92, %s93
      %p102 = scmp.eq.s32.totalorder %s19, 0
      %p103 = por %p101, %p102
      %p104 = scmp.ne.s32.totalorder %s92, %s93
      %p105 = scmp.eq.s32.totalorder %s20, 1
      %p106 = por %p104, %p105
      %p108 = scmp.ne.s32.totalorder %s93, %s107
      %p109 = scmp.eq.s32.totalorder %s20, 0
      %p110 = por %p108, %p109
      %s112 = sadd.s32 %s111, 1
      %p115 = scmp.eq.s32.totalorder %s14, 1
      %p116 = scmp.ne.s32.totalorder %s111, %s113
      %p117 = scmp.eq.s32.totalorder %s14, 0
      %p118 = por %p116, %p117
      %p119 = scmp.ne.s32.totalorder %s111, %s113
      %p120 = scmp.eq.s32.totalorder %s19, 1
      %p121 = por %p119, %p120
      %p122 = scmp.ne.s32.totalorder %s113, %s114
      %p123 = scmp.eq.s32.totalorder %s19, 0
      %p124 = por %p122, %p123
      %p125 = scmp.ne.s32.totalorder %s113, %s114
      %p126 = scmp.eq.s32.totalorder %s20, 1
      %p127 = por %p125, %p126
      %p129 = scmp.ne.s32.totalorder %s114, %s128
      %p130 = scmp.eq.s32.totalorder %s20, 0
      %p131 = por %p129, %p130
      %s132 = ssub.s32 %s14, %s21
      %p133 = scmp.eq.s32.totalorder %s132, 0
      %s135 = sadd.s32 %s134, 1
      %s136 = scalar_select %p133, %s134, %s135
      %p139 = pneg %p133
      %p140 = scmp.eq.s32.totalorder %s14, 1
      %p141 = por %p139, %p140
      %p142 = scmp.ne.s32.totalorder %s134, %s137
      %p143 = scmp.eq.s32.totalorder %s14, 0
      %p144 = por %p142, %p143
      %p145 = scmp.ne.s32.totalorder %s134, %s137
      %p146 = scmp.eq.s32.totalorder %s19, 1
      %p147 = por %p145, %p146
      %p148 = scmp.ne.s32.totalorder %s137, %s138
      %p149 = scmp.eq.s32.totalorder %s19, 0
      %p150 = por %p148, %p149
      %p151 = scmp.ne.s32.totalorder %s137, %s138
      %p152 = scmp.eq.s32.totalorder %s20, 1
      %p153 = por %p151, %p152
      %p155 = scmp.ne.s32.totalorder %s138, %s154
      %p156 = scmp.eq.s32.totalorder %s20, 0
      %p157 = por %p155, %p156
      %p158 = scmp.le.s32.totalorder 1, %s14
      %p159 = scmp.lt.s32.totalorder %s14, 3
      %p160 = pnand %p158, %p159
      %p161 = pneg %p160
      // Predicated region
      $region9: #{tpu_custom_call.1} parent=5 // pred_check
        _
      $region10: #{tpu_custom_call.1} parent=5 // pred_check_branch
        %163 = sbr.rel (%p160) target = $region12
      $region11: #{tpu_custom_call.1} parent=5 // pred_region
        %s164 = ssub.s32 %s14, 1
        // Predicated region
        $region13: #{tpu_custom_call.1} parent=11 // pred_check
          %p165 = pneg %p61
        $region14: #{tpu_custom_call.1} parent=11 // pred_check_branch
          %167 = sbr.rel (%p165) target = $region16
        $region15: #{tpu_custom_call.1} parent=11 // pred_region
          _
        $region16: #{tpu_custom_call.1} parent=11 // pred_fallthru
          _
        // Predicated region
        $region17: #{tpu_custom_call.1} parent=11 // pred_check
          %p168 = pneg %p82
        $region18: #{tpu_custom_call.1} parent=11 // pred_check_branch
          %170 = sbr.rel (%p168) target = $region20
        $region19: #{tpu_custom_call.1} parent=11 // pred_region
          _
        $region20: #{tpu_custom_call.1} parent=11 // pred_fallthru
          _
        // Predicated region
        $region21: #{tpu_custom_call.1} parent=11 // pred_check
          %p171 = pneg %p103
        $region22: #{tpu_custom_call.1} parent=11 // pred_check_branch
          %173 = sbr.rel (%p171) target = $region24
        $region23: #{tpu_custom_call.1} parent=11 // pred_region
          _
        $region24: #{tpu_custom_call.1} parent=11 // pred_fallthru
          _
        // Predicated region
        $region25: #{tpu_custom_call.1} parent=11 // pred_check
          %p174 = pneg %p124
        $region26: #{tpu_custom_call.1} parent=11 // pred_check_branch
          %176 = sbr.rel (%p174) target = $region28
        $region27: #{tpu_custom_call.1} parent=11 // pred_region
          _
        $region28: #{tpu_custom_call.1} parent=11 // pred_fallthru
          _
      $region12: #{tpu_custom_call.1} parent=5 // pred_fallthru
        _
      %p177 = scmp.lt.s32.totalorder %s14, 2
      // Predicated region
      $region29: #{tpu_custom_call.1} parent=5 // pred_check
        %p178 = pneg %p177
      $region30: #{tpu_custom_call.1} parent=5 // pred_check_branch
        %180 = sbr.rel (%p178) target = $region32
      $region31: #{tpu_custom_call.1} parent=5 // pred_region
        // Predicated region
        $region33: #{tpu_custom_call.1} parent=31 // pred_check
          %p181 = pneg %p34
        $region34: #{tpu_custom_call.1} parent=31 // pred_check_branch
          %183 = sbr.rel (%p181) target = $region36
        $region35: #{tpu_custom_call.1} parent=31 // pred_region
          %p184 = scmp.lt.s32.totalorder %s14, 1
          %s185 = scalar_select %p184, %s14, 1
          %s186 = smul.addr %s185, 2
          %s187 = smul.addr %s186, 4
          %s188 = scalar_lea.vmem %s0, %s187
        $region36: #{tpu_custom_call.1} parent=31 // pred_fallthru
          _
      $region32: #{tpu_custom_call.1} parent=5 // pred_fallthru
        _
      %p189 = scmp.le.s32.totalorder 1, %s14
      %p190 = scmp.lt.s32.totalorder %s14, 3
      %p191 = pnand %p189, %p190
      %p192 = pneg %p191
      // Predicated region
      $region37: #{tpu_custom_call.1} parent=5 // pred_check
        _
      $region38: #{tpu_custom_call.1} parent=5 // pred_check_branch
        %194 = sbr.rel (%p191) target = $region40
      $region39: #{tpu_custom_call.1} parent=5 // pred_region
        %s195 = ssub.s32 %s14, 1
        %p196 = scmp.lt.s32.totalorder %s19, 1
        %s197 = scalar_select %p196, %s19, 1
        %s198 = smul.addr %s197, 2
        %s199 = smul.addr %s198, 4
        %s200 = scalar_lea.vmem %s0, %s199
        %p201 = pneg %p40
        %p202 = pneg %p37
        %p203 = pneg %p61
        %p204 = pneg %p58
        %p205 = pneg %p82
        %p206 = pneg %p79
        %p207 = pneg %p103
        %p208 = pneg %p100
        %p209 = pneg %p124
        %p210 = pneg %p121
        %p211 = pneg %p150
        %p212 = pneg %p147
        %s213 = sand.u32 %s137, 1
        %s214 = scalar_lea.sflag [#allocation5], %s213
        %s215 = sand.u32 %s137, 1
        %s216 = smul.addr %s215, 8
        %s217 = scalar_lea.vmem [#allocation4], %s216
        %p218 = scmp.lt.s32.totalorder %s19, 1
        %s219 = scalar_select %p218, %s19, 1
        %s220 = smul.addr %s219, 2
        %s221 = smul.addr %s220, 4
        %s222 = scalar_lea.vmem %s0, %s221
        %v226 = vlaneseq
        %v227 = vand.u32 %v226, 127
        %v228 = vadd.s32 %v227, 128
        %vm229 = vcmp.lt.s32.totalorder %v227, 0
        %v230 = vsub.s32 0, %v227
        %v231 = vsel %vm229, %v230, %v227
        %v232 = vshrl.u32 %v231, 4
        %v233 = vand.u32 %v231, 15
        %v234 = vsub.s32 0, %v233
        %v235 = vsel %vm229, %v234, %v233
        %vm236 = vcmp.lt.s32.totalorder %v228, 0
        %v237 = vsub.s32 0, %v228
        %v238 = vsel %vm236, %v237, %v228
        %v239 = vshrl.u32 %v238, 4
        %v240 = vand.u32 %v238, 15
        %v241 = vsub.s32 0, %v240
        %v242 = vsel %vm236, %v241, %v240
        %vm243 = vcmp.ne.s32.totalorder %v235, 0
        %vm244 = vcmp.ne.s32.totalorder %v242, 0
        %vm245 = vcmp.lt.s32.totalorder %v235, 0
        %vm246 = vcmp.lt.s32.totalorder %v242, 0
        %vm247 = vmand %vm245, %vm243
        %vm248 = vmand %vm246, %vm244
        %v249 = vadd.s32 %v235, 16
        %v250 = vadd.s32 %v242, 16
        %v251 = vsel %vm247, %v249, %v235
        %v252 = vsel %vm248, %v250, %v242
        %vm253 = vcmp.ne.s32.totalorder %v251, 0
        %vm254 = vcmp.ne.s32.totalorder %v252, 0
        %vm255 = vcmp.ne.s32.totalorder %v251, 15
        %vm256 = vcmp.ne.s32.totalorder %v252, 15
        %vm257 = vcmask 1044344
        %258 = vst.msk [vmem:[#allocation2] sm:$0xf] %vm257, 0
        %vm259 = vcmask 134144
        %260 = vst.msk [vmem:[#allocation2 + $0xc] sm:$0xf] %vm259, 0
        %261 = vst.msk [vmem:[#allocation3] sm:$0xf] %vm257, 0
        %262 = vst.msk [vmem:[#allocation3 + $0xc] sm:$0xf] %vm259, 0
        %v263 = vld [vmem:[%s222] sm:$0xff]
        %264 = vst [vmem:[#allocation2 + $0x4] sm:$0xff] %v263
        %v265 = vld [vmem:[#allocation2] sm:$0xff]
        %v266 = vld [vmem:[#allocation2 + $0x8] sm:$0xf]
        %vm267 = vmpackc.low %vm254, %vm253
        %v268 = vsel %vm267, 65537, 0
        %269 = vrot.lane.b32.xlu0 %v268, 111
        %v270 = vpop.permute.xlu0 %269
        %v271 = vrot.slane %v270, 4
        %vm272 = vcmask 908288
        %v273 = vsel %vm272, %v271, %v270
        %vm274 = vcmp.ne.s16.totalorder %v273, 0
        %vm275 = vcmp.ne.s16.totalorder %v271, 0
        %v276 = vsel %vm274, %v265, 0
        %v277 = vsel %vm275, %v266, 0
        %v278 = vld [vmem:[%s1] sm:$0xf]
        %s279 = scalar_lea.vmem %s1, 4
        %v280 = vld [vmem:[%s279] sm:$0xf]
        %v283 = vunpack.c.l.b16 %v265
        %v284 = vunpack.c.h.b16 %v265
        %v285 = vunpack.c.l.b16 %v266
        %v286 = vpack.c.b16 %v283, %v283
        %v287 = vpack.c.b16 %v284, %v284
        %v288 = vpack.c.b16 %v285, %v285
        %289 = vrot.lane.b32.xlu0 %v286, 16
        %v290 = vpop.permute.xlu0 %289
        %291 = vrot.lane.b32.xlu0 %v287, 16
        %v292 = vpop.permute.xlu0 %291
        %293 = vrot.lane.b32.xlu0 %v288, 16
        %v294 = vpop.permute.xlu0 %293
        %vm295 = vcmask 130048
        %v296 = vsel %vm295, %v290, %v292
        %v297 = vsel %vm295, %v292, %v294
        %vm298 = vcmask 64512
        %v300 = vsel %vm298, %v280, 0
        %vm302 = vcmask 1043456
        %v304 = vsel %vm302, %v296, 0
        %v307 = vsel %vm302, %v297, 0
        %309 = vmatprep.subr.bf16.mxu0 %v307
        %310 = vmatpush1.bf16.msra.mxu0 %v304
        %311 = vmatprep.subr.bf16.mxu0 0
        %312 = vmatpush1.bf16.msra.mxu0 0
        %313 = vmatprep.subr.bf16.mxu0 0
        %314 = vmatpush1.bf16.msra.mxu0 0
        %315 = vmatprep.subr.bf16.mxu0 0
        %316 = vmatpush1.bf16.msra.mxu0 0
        %317 = vmatprep.subr.bf16.mxu0 0
        %318 = vmatpush1.bf16.msra.mxu0 0
        %319 = vmatprep.subr.bf16.mxu0 0
        %320 = vmatpush1.bf16.msra.mxu0 0
        %321 = vmatprep.subr.bf16.mxu0 0
        %322 = vmatpush1.bf16.msra.mxu0 0
        %323 = vmatprep.subr.bf16.mxu0 0
        %324 = vmatpush1.bf16.msra.mxu0 0
        %325 = vmatprep.subr.bf16.mxu0 0
        %326 = vmatpush1.bf16.msra.mxu0 0
        %327 = vmatprep.subr.bf16.mxu0 0
        %328 = vmatpush1.bf16.msra.mxu0 0
        %329 = vmatprep.subr.bf16.mxu0 0
        %330 = vmatpush1.bf16.msra.mxu0 0
        %331 = vmatprep.subr.bf16.mxu0 0
        %332 = vmatpush1.bf16.msra.mxu0 0
        %333 = vmatprep.subr.bf16.mxu0 0
        %334 = vmatpush1.bf16.msra.mxu0 0
        %335 = vmatprep.subr.bf16.mxu0 0
        %336 = vmatpush1.bf16.msra.mxu0 0
        %337 = vmatprep.subr.bf16.mxu0 0
        %338 = vmatpush1.bf16.msra.mxu0 0
        %339 = vmatprep.subr.bf16.mxu0 0
        %340 = vmatpush1.bf16.msra.mxu0 0
        %341 = vmatprep.mubr.bf16.mxu0 0
        %342 = vmatmul.mubr.bf16.gmra.mrb[0].mxu0 %v300
        %v343 = vpop.f32.mrb[0].mxu0
        %v344 = vadd.f32 0.0, %v343
        %v345 = vpop.f32.mrb[0].mxu0
        %v346 = vadd.f32 0.0, %v345
        %v347 = vpop.f32.mrb[0].mxu0
        %v348 = vpop.f32.mrb[0].mxu0
        %349 = vdwg.mxu0
        %v352 = vunpack.c.l.b16 %v276
        %v353 = vunpack.c.h.b16 %v276
        %v354 = vunpack.c.l.b16 %v277
        %v355 = vpack.c.b16 %v352, %v352
        %v356 = vpack.c.b16 %v353, %v353
        %v357 = vpack.c.b16 %v354, %v354
        %358 = vrot.lane.b32.xlu0 %v355, 17
        %v359 = vpop.permute.xlu0 %358
        %360 = vrot.lane.b32.xlu0 %v356, 17
        %v361 = vpop.permute.xlu0 %360
        %362 = vrot.lane.b32.xlu0 %v357, 17
        %v363 = vpop.permute.xlu0 %362
        %vm364 = vcmask 138240
        %v365 = vsel %vm364, %v359, %v361
        %v366 = vsel %vm364, %v361, %v363
        %v368 = vsel %vm298, %v278, 0
        %v371 = vsel %vm302, %v365, 0
        %v374 = vsel %vm302, %v366, 0
        %376 = vmatprep.subr.bf16.mxu0 %v374
        %377 = vmatpush1.bf16.msra.mxu0 %v371
        %378 = vmatprep.subr.bf16.mxu0 0
        %379 = vmatpush1.bf16.msra.mxu0 0
        %380 = vmatprep.subr.bf16.mxu0 0
        %381 = vmatpush1.bf16.msra.mxu0 0
        %382 = vmatprep.subr.bf16.mxu0 0
        %383 = vmatpush1.bf16.msra.mxu0 0
        %384 = vmatprep.subr.bf16.mxu0 0
        %385 = vmatpush1.bf16.msra.mxu0 0
        %386 = vmatprep.subr.bf16.mxu0 0
        %387 = vmatpush1.bf16.msra.mxu0 0
        %388 = vmatprep.subr.bf16.mxu0 0
        %389 = vmatpush1.bf16.msra.mxu0 0
        %390 = vmatprep.subr.bf16.mxu0 0
        %391 = vmatpush1.bf16.msra.mxu0 0
        %392 = vmatprep.subr.bf16.mxu0 0
        %393 = vmatpush1.bf16.msra.mxu0 0
        %394 = vmatprep.subr.bf16.mxu0 0
        %395 = vmatpush1.bf16.msra.mxu0 0
        %396 = vmatprep.subr.bf16.mxu0 0
        %397 = vmatpush1.bf16.msra.mxu0 0
        %398 = vmatprep.subr.bf16.mxu0 0
        %399 = vmatpush1.bf16.msra.mxu0 0
        %400 = vmatprep.subr.bf16.mxu0 0
        %401 = vmatpush1.bf16.msra.mxu0 0
        %402 = vmatprep.subr.bf16.mxu0 0
        %403 = vmatpush1.bf16.msra.mxu0 0
        %404 = vmatprep.subr.bf16.mxu0 0
        %405 = vmatpush1.bf16.msra.mxu0 0
        %406 = vmatprep.subr.bf16.mxu0 0
        %407 = vmatpush1.bf16.msra.mxu0 0
        %408 = vmatprep.mubr.bf16.mxu0 0
        %409 = vmatmul.mubr.bf16.gmra.mrb[0].mxu0 %v368
        %v410 = vpop.f32.mrb[0].mxu0
        %v411 = vadd.f32 %v344, %v410
        %v412 = vpop.f32.mrb[0].mxu0
        %v413 = vadd.f32 %v346, %v412
        %v414 = vpop.f32.mrb[0].mxu0
        %v415 = vpop.f32.mrb[0].mxu0
        %416 = vdwg.mxu0
        %vm417 = vmpackc.low %vm256, %vm255
        %v418 = vsel %vm417, 65537, 0
        %419 = vrot.lane.b32.xlu0 %v418, 113
        %v420 = vpop.permute.xlu0 %419
        %v421 = vrot.slane %v420, 4
        %vm422 = vcmask 924672
        %v423 = vsel %vm422, %v421, %v420
        %vm424 = vcmp.ne.s16.totalorder %v423, 0
        %vm425 = vcmp.ne.s16.totalorder %v421, 0
        %v426 = vsel %vm424, %v265, 0
        %v427 = vsel %vm425, %v266, 0
        %s428 = scalar_lea.vmem %s1, 8
        %v429 = vld [vmem:[%s428] sm:$0xf]
        %v432 = vunpack.c.l.b16 %v426
        %v433 = vunpack.c.h.b16 %v426
        %v434 = vunpack.c.l.b16 %v427
        %v435 = vpack.c.b16 %v432, %v432
        %v436 = vpack.c.b16 %v433, %v433
        %v437 = vpack.c.b16 %v434, %v434
        %438 = vrot.lane.b32.xlu0 %v435, 15
        %v439 = vpop.permute.xlu0 %438
        %440 = vrot.lane.b32.xlu0 %v436, 15
        %v441 = vpop.permute.xlu0 %440
        %442 = vrot.lane.b32.xlu0 %v437, 15
        %v443 = vpop.permute.xlu0 %442
        %vm444 = vcmask 121856
        %v445 = vsel %vm444, %v439, %v441
        %v446 = vsel %vm444, %v441, %v443
        %v448 = vsel %vm298, %v429, 0
        %v451 = vsel %vm302, %v445, 0
        %v454 = vsel %vm302, %v446, 0
        %456 = vmatprep.subr.bf16.mxu0 %v454
        %457 = vmatpush1.bf16.msra.mxu0 %v451
        %458 = vmatprep.subr.bf16.mxu0 0
        %459 = vmatpush1.bf16.msra.mxu0 0
        %460 = vmatprep.subr.bf16.mxu0 0
        %461 = vmatpush1.bf16.msra.mxu0 0
        %462 = vmatprep.subr.bf16.mxu0 0
        %463 = vmatpush1.bf16.msra.mxu0 0
        %464 = vmatprep.subr.bf16.mxu0 0
        %465 = vmatpush1.bf16.msra.mxu0 0
        %466 = vmatprep.subr.bf16.mxu0 0
        %467 = vmatpush1.bf16.msra.mxu0 0
        %468 = vmatprep.subr.bf16.mxu0 0
        %469 = vmatpush1.bf16.msra.mxu0 0
        %470 = vmatprep.subr.bf16.mxu0 0
        %471 = vmatpush1.bf16.msra.mxu0 0
        %472 = vmatprep.subr.bf16.mxu0 0
        %473 = vmatpush1.bf16.msra.mxu0 0
        %474 = vmatprep.subr.bf16.mxu0 0
        %475 = vmatpush1.bf16.msra.mxu0 0
        %476 = vmatprep.subr.bf16.mxu0 0
        %477 = vmatpush1.bf16.msra.mxu0 0
        %478 = vmatprep.subr.bf16.mxu0 0
        %479 = vmatpush1.bf16.msra.mxu0 0
        %480 = vmatprep.subr.bf16.mxu0 0
        %481 = vmatpush1.bf16.msra.mxu0 0
        %482 = vmatprep.subr.bf16.mxu0 0
        %483 = vmatpush1.bf16.msra.mxu0 0
        %484 = vmatprep.subr.bf16.mxu0 0
        %485 = vmatpush1.bf16.msra.mxu0 0
        %486 = vmatprep.subr.bf16.mxu0 0
        %487 = vmatpush1.bf16.msra.mxu0 0
        %488 = vmatprep.mubr.bf16.mxu0 0
        %489 = vmatmul.mubr.bf16.gmra.mrb[0].mxu0 %v448
        %v490 = vpop.f32.mrb[0].mxu0
        %v491 = vadd.f32 0.0, %v490
        %v492 = vpop.f32.mrb[0].mxu0
        %v493 = vadd.f32 0.0, %v492
        %v494 = vpop.f32.mrb[0].mxu0
        %v495 = vpop.f32.mrb[0].mxu0
        %496 = vdwg.mxu0
        %v497 = vadd.f32 %v411, %v491
        %v498 = vadd.f32 %v413, %v493
        %499 = vrot.lane.b32.xlu0 %v268, 127
        %v500 = vpop.permute.xlu0 %499
        %v501 = vrot.slane %v500, 4
        %vm502 = vcmask 1039360
        %v503 = vsel %vm502, %v501, %v500
        %vm504 = vcmp.ne.s16.totalorder %v503, 0
        %vm505 = vcmp.ne.s16.totalorder %v501, 0
        %v506 = vsel %vm504, %v265, 0
        %v507 = vsel %vm505, %v266, 0
        %s508 = scalar_lea.vmem %s1, 12
        %v509 = vld [vmem:[%s508] sm:$0xf]
        %v512 = vunpack.c.l.b16 %v506
        %v513 = vunpack.c.h.b16 %v506
        %v514 = vunpack.c.l.b16 %v507
        %v515 = vpack.c.b16 %v512, %v512
        %v516 = vpack.c.b16 %v513, %v513
        %v517 = vpack.c.b16 %v514, %v514
        %518 = vrot.lane.b32.xlu0 %v515, 1
        %v519 = vpop.permute.xlu0 %518
        %520 = vrot.lane.b32.xlu0 %v516, 1
        %v521 = vpop.permute.xlu0 %520
        %522 = vrot.lane.b32.xlu0 %v517, 1
        %v523 = vpop.permute.xlu0 %522
        %vm524 = vcmask 7168
        %v525 = vsel %vm524, %v519, %v521
        %v526 = vsel %vm524, %v521, %v523
        %v528 = vsel %vm298, %v509, 0
        %v531 = vsel %vm302, %v525, 0
        %v534 = vsel %vm302, %v526, 0
        %536 = vmatprep.subr.bf16.mxu0 %v534
        %537 = vmatpush1.bf16.msra.mxu0 %v531
        %538 = vmatprep.subr.bf16.mxu0 0
        %539 = vmatpush1.bf16.msra.mxu0 0
        %540 = vmatprep.subr.bf16.mxu0 0
        %541 = vmatpush1.bf16.msra.mxu0 0
        %542 = vmatprep.subr.bf16.mxu0 0
        %543 = vmatpush1.bf16.msra.mxu0 0
        %544 = vmatprep.subr.bf16.mxu0 0
        %545 = vmatpush1.bf16.msra.mxu0 0
        %546 = vmatprep.subr.bf16.mxu0 0
        %547 = vmatpush1.bf16.msra.mxu0 0
        %548 = vmatprep.subr.bf16.mxu0 0
        %549 = vmatpush1.bf16.msra.mxu0 0
        %550 = vmatprep.subr.bf16.mxu0 0
        %551 = vmatpush1.bf16.msra.mxu0 0
        %552 = vmatprep.subr.bf16.mxu0 0
        %553 = vmatpush1.bf16.msra.mxu0 0
        %554 = vmatprep.subr.bf16.mxu0 0
        %555 = vmatpush1.bf16.msra.mxu0 0
        %556 = vmatprep.subr.bf16.mxu0 0
        %557 = vmatpush1.bf16.msra.mxu0 0
        %558 = vmatprep.subr.bf16.mxu0 0
        %559 = vmatpush1.bf16.msra.mxu0 0
        %560 = vmatprep.subr.bf16.mxu0 0
        %561 = vmatpush1.bf16.msra.mxu0 0
        %562 = vmatprep.subr.bf16.mxu0 0
        %563 = vmatpush1.bf16.msra.mxu0 0
        %564 = vmatprep.subr.bf16.mxu0 0
        %565 = vmatpush1.bf16.msra.mxu0 0
        %566 = vmatprep.subr.bf16.mxu0 0
        %567 = vmatpush1.bf16.msra.mxu0 0
        %568 = vmatprep.mubr.bf16.mxu0 0
        %569 = vmatmul.mubr.bf16.gmra.mrb[0].mxu0 %v528
        %v570 = vpop.f32.mrb[0].mxu0
        %v571 = vadd.f32 0.0, %v570
        %v572 = vpop.f32.mrb[0].mxu0
        %v573 = vadd.f32 0.0, %v572
        %v574 = vpop.f32.mrb[0].mxu0
        %v575 = vpop.f32.mrb[0].mxu0
        %576 = vdwg.mxu0
        %v577 = vadd.f32 %v497, %v571
        %v578 = vadd.f32 %v498, %v573
        %v579 = vld [vmem:[#allocation2 + $0x4] sm:$0xff]
        %s580 = scalar_lea.vmem %s1, 16
        %v581 = vld [vmem:[%s580] sm:$0xf]
        %v583 = vunpack.c.l.b16 %v579
        %v584 = vunpack.c.h.b16 %v579
        %v585 = vpack.c.b16 %v583, %v583
        %v586 = vpack.c.b16 %v584, %v584
        %v588 = vsel %vm298, %v581, 0
        %v591 = vsel %vm302, %v585, 0
        %v594 = vsel %vm302, %v586, 0
        %596 = vmatprep.subr.bf16.mxu0 %v594
        %597 = vmatpush1.bf16.msra.mxu0 %v591
        %598 = vmatprep.subr.bf16.mxu0 0
        %599 = vmatpush1.bf16.msra.mxu0 0
        %600 = vmatprep.subr.bf16.mxu0 0
        %601 = vmatpush1.bf16.msra.mxu0 0
        %602 = vmatprep.subr.bf16.mxu0 0
        %603 = vmatpush1.bf16.msra.mxu0 0
        %604 = vmatprep.subr.bf16.mxu0 0
        %605 = vmatpush1.bf16.msra.mxu0 0
        %606 = vmatprep.subr.bf16.mxu0 0
        %607 = vmatpush1.bf16.msra.mxu0 0
        %608 = vmatprep.subr.bf16.mxu0 0
        %609 = vmatpush1.bf16.msra.mxu0 0
        %610 = vmatprep.subr.bf16.mxu0 0
        %611 = vmatpush1.bf16.msra.mxu0 0
        %612 = vmatprep.subr.bf16.mxu0 0
        %613 = vmatpush1.bf16.msra.mxu0 0
        %614 = vmatprep.subr.bf16.mxu0 0
        %615 = vmatpush1.bf16.msra.mxu0 0
        %616 = vmatprep.subr.bf16.mxu0 0
        %617 = vmatpush1.bf16.msra.mxu0 0
        %618 = vmatprep.subr.bf16.mxu0 0
        %619 = vmatpush1.bf16.msra.mxu0 0
        %620 = vmatprep.subr.bf16.mxu0 0
        %621 = vmatpush1.bf16.msra.mxu0 0
        %622 = vmatprep.subr.bf16.mxu0 0
        %623 = vmatpush1.bf16.msra.mxu0 0
        %624 = vmatprep.subr.bf16.mxu0 0
        %625 = vmatpush1.bf16.msra.mxu0 0
        %626 = vmatprep.subr.bf16.mxu0 0
        %627 = vmatpush1.bf16.msra.mxu0 0
        %628 = vmatprep.mubr.bf16.mxu0 0
        %629 = vmatmul.mubr.bf16.gmra.mrb[0].mxu0 %v588
        %v630 = vpop.f32.mrb[0].mxu0
        %v631 = vadd.f32 0.0, %v630
        %v632 = vpop.f32.mrb[0].mxu0
        %v633 = vadd.f32 0.0, %v632
        %v634 = vpop.f32.mrb[0].mxu0
        %v635 = vpop.f32.mrb[0].mxu0
        %636 = vdwg.mxu0
        %v637 = vadd.f32 %v577, %v631
        %v638 = vadd.f32 %v578, %v633
        %v639 = vld [vmem:[#allocation2 + $0x4] sm:$0xff]
        %v640 = vld [vmem:[#allocation2 + $0xc] sm:$0xf]
        %641 = vrot.lane.b32.xlu0 %v418, 1
        %v642 = vpop.permute.xlu0 %641
        %v643 = vrot.slane %v642, 4
        %v644 = vsel %vm524, %v643, %v642
        %vm645 = vcmp.ne.s16.totalorder %v644, 0
        %vm646 = vcmp.ne.s16.totalorder %v643, 0
        %v647 = vsel %vm645, %v639, 0
        %v648 = vsel %vm646, %v640, 0
        %s649 = scalar_lea.vmem %s1, 20
        %v650 = vld [vmem:[%s649] sm:$0xf]
        %v653 = vunpack.c.l.b16 %v647
        %v654 = vunpack.c.h.b16 %v647
        %v655 = vunpack.c.l.b16 %v648
        %v656 = vpack.c.b16 %v653, %v653
        %v657 = vpack.c.b16 %v654, %v654
        %v658 = vpack.c.b16 %v655, %v655
        %659 = vrot.lane.b32.xlu0 %v656, 127
        %v660 = vpop.permute.xlu0 %659
        %661 = vrot.lane.b32.xlu0 %v657, 127
        %v662 = vpop.permute.xlu0 %661
        %663 = vrot.lane.b32.xlu0 %v658, 127
        %v664 = vpop.permute.xlu0 %663
        %v665 = vsel %vm502, %v660, %v662
        %v666 = vsel %vm502, %v662, %v664
        %v668 = vsel %vm298, %v650, 0
        %v671 = vsel %vm302, %v665, 0
        %v674 = vsel %vm302, %v666, 0
        %676 = vmatprep.subr.bf16.mxu0 %v674
        %677 = vmatpush1.bf16.msra.mxu0 %v671
        %678 = vmatprep.subr.bf16.mxu0 0
        %679 = vmatpush1.bf16.msra.mxu0 0
        %680 = vmatprep.subr.bf16.mxu0 0
        %681 = vmatpush1.bf16.msra.mxu0 0
        %682 = vmatprep.subr.bf16.mxu0 0
        %683 = vmatpush1.bf16.msra.mxu0 0
        %684 = vmatprep.subr.bf16.mxu0 0
        %685 = vmatpush1.bf16.msra.mxu0 0
        %686 = vmatprep.subr.bf16.mxu0 0
        %687 = vmatpush1.bf16.msra.mxu0 0
        %688 = vmatprep.subr.bf16.mxu0 0
        %689 = vmatpush1.bf16.msra.mxu0 0
        %690 = vmatprep.subr.bf16.mxu0 0
        %691 = vmatpush1.bf16.msra.mxu0 0
        %692 = vmatprep.subr.bf16.mxu0 0
        %693 = vmatpush1.bf16.msra.mxu0 0
        %694 = vmatprep.subr.bf16.mxu0 0
        %695 = vmatpush1.bf16.msra.mxu0 0
        %696 = vmatprep.subr.bf16.mxu0 0
        %697 = vmatpush1.bf16.msra.mxu0 0
        %698 = vmatprep.subr.bf16.mxu0 0
        %699 = vmatpush1.bf16.msra.mxu0 0
        %700 = vmatprep.subr.bf16.mxu0 0
        %701 = vmatpush1.bf16.msra.mxu0 0
        %702 = vmatprep.subr.bf16.mxu0 0
        %703 = vmatpush1.bf16.msra.mxu0 0
        %704 = vmatprep.subr.bf16.mxu0 0
        %705 = vmatpush1.bf16.msra.mxu0 0
        %706 = vmatprep.subr.bf16.mxu0 0
        %707 = vmatpush1.bf16.msra.mxu0 0
        %708 = vmatprep.mubr.bf16.mxu0 0
        %709 = vmatmul.mubr.bf16.gmra.mrb[0].mxu0 %v668
        %v710 = vpop.f32.mrb[0].mxu0
        %v711 = vadd.f32 0.0, %v710
        %v712 = vpop.f32.mrb[0].mxu0
        %v713 = vadd.f32 0.0, %v712
        %v714 = vpop.f32.mrb[0].mxu0
        %v715 = vpop.f32.mrb[0].mxu0
        %716 = vdwg.mxu0
        %v717 = vadd.f32 %v637, %v711
        %v718 = vadd.f32 %v638, %v713
        %719 = vrot.lane.b32.xlu0 %v268, 15
        %v720 = vpop.permute.xlu0 %719
        %v721 = vrot.slane %v720, 4
        %v722 = vsel %vm444, %v721, %v720
        %vm723 = vcmp.ne.s16.totalorder %v722, 0
        %vm724 = vcmp.ne.s16.totalorder %v721, 0
        %v725 = vsel %vm723, %v639, 0
        %v726 = vsel %vm724, %v640, 0
        %s727 = scalar_lea.vmem %s1, 24
        %v728 = vld [vmem:[%s727] sm:$0xf]
        %v731 = vunpack.c.l.b16 %v725
        %v732 = vunpack.c.h.b16 %v725
        %v733 = vunpack.c.l.b16 %v726
        %v734 = vpack.c.b16 %v731, %v731
        %v735 = vpack.c.b16 %v732, %v732
        %v736 = vpack.c.b16 %v733, %v733
        %737 = vrot.lane.b32.xlu0 %v734, 113
        %v738 = vpop.permute.xlu0 %737
        %739 = vrot.lane.b32.xlu0 %v735, 113
        %v740 = vpop.permute.xlu0 %739
        %741 = vrot.lane.b32.xlu0 %v736, 113
        %v742 = vpop.permute.xlu0 %741
        %v743 = vsel %vm422, %v738, %v740
        %v744 = vsel %vm422, %v740, %v742
        %v746 = vsel %vm298, %v728, 0
        %v749 = vsel %vm302, %v743, 0
        %v752 = vsel %vm302, %v744, 0
        %754 = vmatprep.subr.bf16.mxu0 %v752
        %755 = vmatpush1.bf16.msra.mxu0 %v749
        %756 = vmatprep.subr.bf16.mxu0 0
        %757 = vmatpush1.bf16.msra.mxu0 0
        %758 = vmatprep.subr.bf16.mxu0 0
        %759 = vmatpush1.bf16.msra.mxu0 0
        %760 = vmatprep.subr.bf16.mxu0 0
        %761 = vmatpush1.bf16.msra.mxu0 0
        %762 = vmatprep.subr.bf16.mxu0 0
        %763 = vmatpush1.bf16.msra.mxu0 0
        %764 = vmatprep.subr.bf16.mxu0 0
        %765 = vmatpush1.bf16.msra.mxu0 0
        %766 = vmatprep.subr.bf16.mxu0 0
        %767 = vmatpush1.bf16.msra.mxu0 0
        %768 = vmatprep.subr.bf16.mxu0 0
        %769 = vmatpush1.bf16.msra.mxu0 0
        %770 = vmatprep.subr.bf16.mxu0 0
        %771 = vmatpush1.bf16.msra.mxu0 0
        %772 = vmatprep.subr.bf16.mxu0 0
        %773 = vmatpush1.bf16.msra.mxu0 0
        %774 = vmatprep.subr.bf16.mxu0 0
        %775 = vmatpush1.bf16.msra.mxu0 0
        %776 = vmatprep.subr.bf16.mxu0 0
        %777 = vmatpush1.bf16.msra.mxu0 0
        %778 = vmatprep.subr.bf16.mxu0 0
        %779 = vmatpush1.bf16.msra.mxu0 0
        %780 = vmatprep.subr.bf16.mxu0 0
        %781 = vmatpush1.bf16.msra.mxu0 0
        %782 = vmatprep.subr.bf16.mxu0 0
        %783 = vmatpush1.bf16.msra.mxu0 0
        %784 = vmatprep.subr.bf16.mxu0 0
        %785 = vmatpush1.bf16.msra.mxu0 0
        %786 = vmatprep.mubr.bf16.mxu0 0
        %787 = vmatmul.mubr.bf16.gmra.mrb[0].mxu0 %v746
        %v788 = vpop.f32.mrb[0].mxu0
        %v789 = vadd.f32 0.0, %v788
        %v790 = vpop.f32.mrb[0].mxu0
        %v791 = vadd.f32 0.0, %v790
        %v792 = vpop.f32.mrb[0].mxu0
        %v793 = vpop.f32.mrb[0].mxu0
        %794 = vdwg.mxu0
        %v795 = vadd.f32 %v717, %v789
        %v796 = vadd.f32 %v718, %v791
        %s797 = scalar_lea.vmem %s1, 28
        %v798 = vld [vmem:[%s797] sm:$0xf]
        %v801 = vunpack.c.l.b16 %v639
        %v802 = vunpack.c.h.b16 %v639
        %v803 = vunpack.c.l.b16 %v640
        %v804 = vpack.c.b16 %v801, %v801
        %v805 = vpack.c.b16 %v802, %v802
        %v806 = vpack.c.b16 %v803, %v803
        %807 = vrot.lane.b32.xlu0 %v804, 112
        %v808 = vpop.permute.xlu0 %807
        %809 = vrot.lane.b32.xlu0 %v805, 112
        %v810 = vpop.permute.xlu0 %809
        %811 = vrot.lane.b32.xlu0 %v806, 112
        %v812 = vpop.permute.xlu0 %811
        %vm813 = vcmask 916480
        %v814 = vsel %vm813, %v808, %v810
        %v815 = vsel %vm813, %v810, %v812
        %v817 = vsel %vm298, %v798, 0
        %v820 = vsel %vm302, %v814, 0
        %v823 = vsel %vm302, %v815, 0
        %825 = vmatprep.subr.bf16.mxu0 %v823
        %826 = vmatpush1.bf16.msra.mxu0 %v820
        %827 = vmatprep.subr.bf16.mxu0 0
        %828 = vmatpush1.bf16.msra.mxu0 0
        %829 = vmatprep.subr.bf16.mxu0 0
        %830 = vmatpush1.bf16.msra.mxu0 0
        %831 = vmatprep.subr.bf16.mxu0 0
        %832 = vmatpush1.bf16.msra.mxu0 0
        %833 = vmatprep.subr.bf16.mxu0 0
        %834 = vmatpush1.bf16.msra.mxu0 0
        %835 = vmatprep.subr.bf16.mxu0 0
        %836 = vmatpush1.bf16.msra.mxu0 0
        %837 = vmatprep.subr.bf16.mxu0 0
        %838 = vmatpush1.bf16.msra.mxu0 0
        %839 = vmatprep.subr.bf16.mxu0 0
        %840 = vmatpush1.bf16.msra.mxu0 0
        %841 = vmatprep.subr.bf16.mxu0 0
        %842 = vmatpush1.bf16.msra.mxu0 0
        %843 = vmatprep.subr.bf16.mxu0 0
        %844 = vmatpush1.bf16.msra.mxu0 0
        %845 = vmatprep.subr.bf16.mxu0 0
        %846 = vmatpush1.bf16.msra.mxu0 0
        %847 = vmatprep.subr.bf16.mxu0 0
        %848 = vmatpush1.bf16.msra.mxu0 0
        %849 = vmatprep.subr.bf16.mxu0 0
        %850 = vmatpush1.bf16.msra.mxu0 0
        %851 = vmatprep.subr.bf16.mxu0 0
        %852 = vmatpush1.bf16.msra.mxu0 0
        %853 = vmatprep.subr.bf16.mxu0 0
        %854 = vmatpush1.bf16.msra.mxu0 0
        %855 = vmatprep.subr.bf16.mxu0 0
        %856 = vmatpush1.bf16.msra.mxu0 0
        %857 = vmatprep.mubr.bf16.mxu0 0
        %858 = vmatmul.mubr.bf16.gmra.mrb[0].mxu0 %v817
        %v859 = vpop.f32.mrb[0].mxu0
        %v860 = vadd.f32 0.0, %v859
        %v861 = vpop.f32.mrb[0].mxu0
        %v862 = vadd.f32 0.0, %v861
        %v863 = vpop.f32.mrb[0].mxu0
        %v864 = vpop.f32.mrb[0].mxu0
        %865 = vdwg.mxu0
        %v866 = vadd.f32 %v795, %v860
        %v867 = vadd.f32 %v796, %v862
        %868 = vrot.lane.b32.xlu0 %v418, 17
        %v869 = vpop.permute.xlu0 %868
        %v870 = vrot.slane %v869, 4
        %v871 = vsel %vm364, %v870, %v869
        %vm872 = vcmp.ne.s16.totalorder %v871, 0
        %vm873 = vcmp.ne.s16.totalorder %v870, 0
        %v874 = vsel %vm872, %v639, 0
        %v875 = vsel %vm873, %v640, 0
        %s876 = scalar_lea.vmem %s1, 32
        %v877 = vld [vmem:[%s876] sm:$0xf]
        %v880 = vunpack.c.l.b16 %v874
        %v881 = vunpack.c.h.b16 %v874
        %v882 = vunpack.c.l.b16 %v875
        %v883 = vpack.c.b16 %v880, %v880
        %v884 = vpack.c.b16 %v881, %v881
        %v885 = vpack.c.b16 %v882, %v882
        %886 = vrot.lane.b32.xlu0 %v883, 111
        %v887 = vpop.permute.xlu0 %886
        %888 = vrot.lane.b32.xlu0 %v884, 111
        %v889 = vpop.permute.xlu0 %888
        %890 = vrot.lane.b32.xlu0 %v885, 111
        %v891 = vpop.permute.xlu0 %890
        %v892 = vsel %vm272, %v887, %v889
        %v893 = vsel %vm272, %v889, %v891
        %v895 = vsel %vm298, %v877, 0
        %v898 = vsel %vm302, %v892, 0
        %v901 = vsel %vm302, %v893, 0
        %903 = vmatprep.subr.bf16.mxu0 %v901
        %904 = vmatpush1.bf16.msra.mxu0 %v898
        %905 = vmatprep.subr.bf16.mxu0 0
        %906 = vmatpush1.bf16.msra.mxu0 0
        %907 = vmatprep.subr.bf16.mxu0 0
        %908 = vmatpush1.bf16.msra.mxu0 0
        %909 = vmatprep.subr.bf16.mxu0 0
        %910 = vmatpush1.bf16.msra.mxu0 0
        %911 = vmatprep.subr.bf16.mxu0 0
        %912 = vmatpush1.bf16.msra.mxu0 0
        %913 = vmatprep.subr.bf16.mxu0 0
        %914 = vmatpush1.bf16.msra.mxu0 0
        %915 = vmatprep.subr.bf16.mxu0 0
        %916 = vmatpush1.bf16.msra.mxu0 0
        %917 = vmatprep.subr.bf16.mxu0 0
        %918 = vmatpush1.bf16.msra.mxu0 0
        %919 = vmatprep.subr.bf16.mxu0 0
        %920 = vmatpush1.bf16.msra.mxu0 0
        %921 = vmatprep.subr.bf16.mxu0 0
        %922 = vmatpush1.bf16.msra.mxu0 0
        %923 = vmatprep.subr.bf16.mxu0 0
        %924 = vmatpush1.bf16.msra.mxu0 0
        %925 = vmatprep.subr.bf16.mxu0 0
        %926 = vmatpush1.bf16.msra.mxu0 0
        %927 = vmatprep.subr.bf16.mxu0 0
        %928 = vmatpush1.bf16.msra.mxu0 0
        %929 = vmatprep.subr.bf16.mxu0 0
        %930 = vmatpush1.bf16.msra.mxu0 0
        %931 = vmatprep.subr.bf16.mxu0 0
        %932 = vmatpush1.bf16.msra.mxu0 0
        %933 = vmatprep.subr.bf16.mxu0 0
        %934 = vmatpush1.bf16.msra.mxu0 0
        %935 = vmatprep.mubr.bf16.mxu0 0
        %936 = vmatmul.mubr.bf16.gmra.mrb[0].mxu0 %v895
        %v937 = vpop.f32.mrb[0].mxu0
        %v938 = vadd.f32 0.0, %v937
        %v939 = vpop.f32.mrb[0].mxu0
        %v940 = vadd.f32 0.0, %v939
        %v941 = vpop.f32.mrb[0].mxu0
        %v942 = vpop.f32.mrb[0].mxu0
        %943 = vdwg.mxu0
        %v944 = vadd.f32 %v866, %v938
        %v945 = vadd.f32 %v867, %v940
        %v946 = vld [vmem:[%s2] sm:$0xff]
        %948 = vset.pattern.permute.xlu0 0
        %949 = vperm.xlu0 %948, %v946
        %v950 = vpop.permute.xlu0 %949
        %v952 = vadd.f32 %v944, %v950
        %v953 = vadd.f32 %v945, %v950
        %v954 = vmax.f32 %v952, 0.0
        %v955 = vmax.f32 %v953, 0.0
        %v956 = vpack.c.bf16 %v954, %v954
        %v957 = vpack.c.bf16 %v955, %v955
        %v960 = vunpack.c.l.b16 %v956
        %v961 = vunpack.c.l.b16 %v957
        %v962 = vpack.c.b16 %v961, %v960
        %964 = vst [vmem:[#allocation3 + $0x4] sm:$0xff] %v962
        %v965 = vld [vmem:[#allocation3] sm:$0xff]
        %v966 = vld [vmem:[#allocation3 + $0x8] sm:$0xf]
        %v967 = vsel %vm274, %v965, 0
        %v968 = vsel %vm275, %v966, 0
        %v969 = vld [vmem:[%s3] sm:$0xf]
        %s970 = scalar_lea.vmem %s3, 4
        %v971 = vld [vmem:[%s970] sm:$0xf]
        %v974 = vunpack.c.l.b16 %v965
        %v975 = vunpack.c.h.b16 %v965
        %v976 = vunpack.c.l.b16 %v966
        %v977 = vpack.c.b16 %v974, %v974
        %v978 = vpack.c.b16 %v975, %v975
        %v979 = vpack.c.b16 %v976, %v976
        %980 = vrot.lane.b32.xlu0 %v977, 16
        %v981 = vpop.permute.xlu0 %980
        %982 = vrot.lane.b32.xlu0 %v978, 16
        %v983 = vpop.permute.xlu0 %982
        %984 = vrot.lane.b32.xlu0 %v979, 16
        %v985 = vpop.permute.xlu0 %984
        %v986 = vsel %vm295, %v981, %v983
        %v987 = vsel %vm295, %v983, %v985
        %v989 = vsel %vm298, %v971, 0
        %v992 = vsel %vm302, %v986, 0
        %v995 = vsel %vm302, %v987, 0
        %997 = vmatprep.subr.bf16.mxu0 %v995
        %998 = vmatpush1.bf16.msra.mxu0 %v992
        %999 = vmatprep.subr.bf16.mxu0 0
        %1000 = vmatpush1.bf16.msra.mxu0 0
        %1001 = vmatprep.subr.bf16.mxu0 0
        %1002 = vmatpush1.bf16.msra.mxu0 0
        %1003 = vmatprep.subr.bf16.mxu0 0
        %1004 = vmatpush1.bf16.msra.mxu0 0
        %1005 = vmatprep.subr.bf16.mxu0 0
        %1006 = vmatpush1.bf16.msra.mxu0 0
        %1007 = vmatprep.subr.bf16.mxu0 0
        %1008 = vmatpush1.bf16.msra.mxu0 0
        %1009 = vmatprep.subr.bf16.mxu0 0
        %1010 = vmatpush1.bf16.msra.mxu0 0
        %1011 = vmatprep.subr.bf16.mxu0 0
        %1012 = vmatpush1.bf16.msra.mxu0 0
        %1013 = vmatprep.subr.bf16.mxu0 0
        %1014 = vmatpush1.bf16.msra.mxu0 0
        %1015 = vmatprep.subr.bf16.mxu0 0
        %1016 = vmatpush1.bf16.msra.mxu0 0
        %1017 = vmatprep.subr.bf16.mxu0 0
        %1018 = vmatpush1.bf16.msra.mxu0 0
        %1019 = vmatprep.subr.bf16.mxu0 0
        %1020 = vmatpush1.bf16.msra.mxu0 0
        %1021 = vmatprep.subr.bf16.mxu0 0
        %1022 = vmatpush1.bf16.msra.mxu0 0
        %1023 = vmatprep.subr.bf16.mxu0 0
        %1024 = vmatpush1.bf16.msra.mxu0 0
        %1025 = vmatprep.subr.bf16.mxu0 0
        %1026 = vmatpush1.bf16.msra.mxu0 0
        %1027 = vmatprep.subr.bf16.mxu0 0
        %1028 = vmatpush1.bf16.msra.mxu0 0
        %1029 = vmatprep.mubr.bf16.mxu0 0
        %1030 = vmatmul.mubr.bf16.gmra.mrb[0].mxu0 %v989
        %v1031 = vpop.f32.mrb[0].mxu0
        %v1032 = vadd.f32 0.0, %v1031
        %v1033 = vpop.f32.mrb[0].mxu0
        %v1034 = vadd.f32 0.0, %v1033
        %v1035 = vpop.f32.mrb[0].mxu0
        %v1036 = vpop.f32.mrb[0].mxu0
        %1037 = vdwg.mxu0
        %v1040 = vunpack.c.l.b16 %v967
        %v1041 = vunpack.c.h.b16 %v967
        %v1042 = vunpack.c.l.b16 %v968
        %v1043 = vpack.c.b16 %v1040, %v1040
        %v1044 = vpack.c.b16 %v1041, %v1041
        %v1045 = vpack.c.b16 %v1042, %v1042
        %1046 = vrot.lane.b32.xlu0 %v1043, 17
        %v1047 = vpop.permute.xlu0 %1046
        %1048 = vrot.lane.b32.xlu0 %v1044, 17
        %v1049 = vpop.permute.xlu0 %1048
        %1050 = vrot.lane.b32.xlu0 %v1045, 17
        %v1051 = vpop.permute.xlu0 %1050
        %v1052 = vsel %vm364, %v1047, %v1049
        %v1053 = vsel %vm364, %v1049, %v1051
        %v1055 = vsel %vm298, %v969, 0
        %v1058 = vsel %vm302, %v1052, 0
        %v1061 = vsel %vm302, %v1053, 0
        %1063 = vmatprep.subr.bf16.mxu0 %v1061
        %1064 = vmatpush1.bf16.msra.mxu0 %v1058
        %1065 = vmatprep.subr.bf16.mxu0 0
        %1066 = vmatpush1.bf16.msra.mxu0 0
        %1067 = vmatprep.subr.bf16.mxu0 0
        %1068 = vmatpush1.bf16.msra.mxu0 0
        %1069 = vmatprep.subr.bf16.mxu0 0
        %1070 = vmatpush1.bf16.msra.mxu0 0
        %1071 = vmatprep.subr.bf16.mxu0 0
        %1072 = vmatpush1.bf16.msra.mxu0 0
        %1073 = vmatprep.subr.bf16.mxu0 0
        %1074 = vmatpush1.bf16.msra.mxu0 0
        %1075 = vmatprep.subr.bf16.mxu0 0
        %1076 = vmatpush1.bf16.msra.mxu0 0
        %1077 = vmatprep.subr.bf16.mxu0 0
        %1078 = vmatpush1.bf16.msra.mxu0 0
        %1079 = vmatprep.subr.bf16.mxu0 0
        %1080 = vmatpush1.bf16.msra.mxu0 0
        %1081 = vmatprep.subr.bf16.mxu0 0
        %1082 = vmatpush1.bf16.msra.mxu0 0
        %1083 = vmatprep.subr.bf16.mxu0 0
        %1084 = vmatpush1.bf16.msra.mxu0 0
        %1085 = vmatprep.subr.bf16.mxu0 0
        %1086 = vmatpush1.bf16.msra.mxu0 0
        %1087 = vmatprep.subr.bf16.mxu0 0
        %1088 = vmatpush1.bf16.msra.mxu0 0
        %1089 = vmatprep.subr.bf16.mxu0 0
        %1090 = vmatpush1.bf16.msra.mxu0 0
        %1091 = vmatprep.subr.bf16.mxu0 0
        %1092 = vmatpush1.bf16.msra.mxu0 0
        %1093 = vmatprep.subr.bf16.mxu0 0
        %1094 = vmatpush1.bf16.msra.mxu0 0
        %1095 = vmatprep.mubr.bf16.mxu0 0
        %1096 = vmatmul.mubr.bf16.gmra.mrb[0].mxu0 %v1055
        %v1097 = vpop.f32.mrb[0].mxu0
        %v1098 = vadd.f32 %v1032, %v1097
        %v1099 = vpop.f32.mrb[0].mxu0
        %v1100 = vadd.f32 %v1034, %v1099
        %v1101 = vpop.f32.mrb[0].mxu0
        %v1102 = vpop.f32.mrb[0].mxu0
        %1103 = vdwg.mxu0
        %v1104 = vsel %vm424, %v965, 0
        %v1105 = vsel %vm425, %v966, 0
        %s1106 = scalar_lea.vmem %s3, 8
        %v1107 = vld [vmem:[%s1106] sm:$0xf]
        %v1110 = vunpack.c.l.b16 %v1104
        %v1111 = vunpack.c.h.b16 %v1104
        %v1112 = vunpack.c.l.b16 %v1105
        %v1113 = vpack.c.b16 %v1110, %v1110
        %v1114 = vpack.c.b16 %v1111, %v1111
        %v1115 = vpack.c.b16 %v1112, %v1112
        %1116 = vrot.lane.b32.xlu0 %v1113, 15
        %v1117 = vpop.permute.xlu0 %1116
        %1118 = vrot.lane.b32.xlu0 %v1114, 15
        %v1119 = vpop.permute.xlu0 %1118
        %1120 = vrot.lane.b32.xlu0 %v1115, 15
        %v1121 = vpop.permute.xlu0 %1120
        %v1122 = vsel %vm444, %v1117, %v1119
        %v1123 = vsel %vm444, %v1119, %v1121
        %v1125 = vsel %vm298, %v1107, 0
        %v1128 = vsel %vm302, %v1122, 0
        %v1131 = vsel %vm302, %v1123, 0
        %1133 = vmatprep.subr.bf16.mxu0 %v1131
        %1134 = vmatpush1.bf16.msra.mxu0 %v1128
        %1135 = vmatprep.subr.bf16.mxu0 0
        %1136 = vmatpush1.bf16.msra.mxu0 0
        %1137 = vmatprep.subr.bf16.mxu0 0
        %1138 = vmatpush1.bf16.msra.mxu0 0
        %1139 = vmatprep.subr.bf16.mxu0 0
        %1140 = vmatpush1.bf16.msra.mxu0 0
        %1141 = vmatprep.subr.bf16.mxu0 0
        %1142 = vmatpush1.bf16.msra.mxu0 0
        %1143 = vmatprep.subr.bf16.mxu0 0
        %1144 = vmatpush1.bf16.msra.mxu0 0
        %1145 = vmatprep.subr.bf16.mxu0 0
        %1146 = vmatpush1.bf16.msra.mxu0 0
        %1147 = vmatprep.subr.bf16.mxu0 0
        %1148 = vmatpush1.bf16.msra.mxu0 0
        %1149 = vmatprep.subr.bf16.mxu0 0
        %1150 = vmatpush1.bf16.msra.mxu0 0
        %1151 = vmatprep.subr.bf16.mxu0 0
        %1152 = vmatpush1.bf16.msra.mxu0 0
        %1153 = vmatprep.subr.bf16.mxu0 0
        %1154 = vmatpush1.bf16.msra.mxu0 0
        %1155 = vmatprep.subr.bf16.mxu0 0
        %1156 = vmatpush1.bf16.msra.mxu0 0
        %1157 = vmatprep.subr.bf16.mxu0 0
        %1158 = vmatpush1.bf16.msra.mxu0 0
        %1159 = vmatprep.subr.bf16.mxu0 0
        %1160 = vmatpush1.bf16.msra.mxu0 0
        %1161 = vmatprep.subr.bf16.mxu0 0
        %1162 = vmatpush1.bf16.msra.mxu0 0
        %1163 = vmatprep.subr.bf16.mxu0 0
        %1164 = vmatpush1.bf16.msra.mxu0 0
        %1165 = vmatprep.mubr.bf16.mxu0 0
        %1166 = vmatmul.mubr.bf16.gmra.mrb[0].mxu0 %v1125
        %v1167 = vpop.f32.mrb[0].mxu0
        %v1168 = vadd.f32 0.0, %v1167
        %v1169 = vpop.f32.mrb[0].mxu0
        %v1170 = vadd.f32 0.0, %v1169
        %v1171 = vpop.f32.mrb[0].mxu0
        %v1172 = vpop.f32.mrb[0].mxu0
        %1173 = vdwg.mxu0
        %v1174 = vadd.f32 %v1098, %v1168
        %v1175 = vadd.f32 %v1100, %v1170
        %v1176 = vsel %vm504, %v965, 0
        %v1177 = vsel %vm505, %v966, 0
        %s1178 = scalar_lea.vmem %s3, 12
        %v1179 = vld [vmem:[%s1178] sm:$0xf]
        %v1182 = vunpack.c.l.b16 %v1176
        %v1183 = vunpack.c.h.b16 %v1176
        %v1184 = vunpack.c.l.b16 %v1177
        %v1185 = vpack.c.b16 %v1182, %v1182
        %v1186 = vpack.c.b16 %v1183, %v1183
        %v1187 = vpack.c.b16 %v1184, %v1184
        %1188 = vrot.lane.b32.xlu0 %v1185, 1
        %v1189 = vpop.permute.xlu0 %1188
        %1190 = vrot.lane.b32.xlu0 %v1186, 1
        %v1191 = vpop.permute.xlu0 %1190
        %1192 = vrot.lane.b32.xlu0 %v1187, 1
        %v1193 = vpop.permute.xlu0 %1192
        %v1194 = vsel %vm524, %v1189, %v1191
        %v1195 = vsel %vm524, %v1191, %v1193
        %v1197 = vsel %vm298, %v1179, 0
        %v1200 = vsel %vm302, %v1194, 0
        %v1203 = vsel %vm302, %v1195, 0
        %1205 = vmatprep.subr.bf16.mxu0 %v1203
        %1206 = vmatpush1.bf16.msra.mxu0 %v1200
        %1207 = vmatprep.subr.bf16.mxu0 0
        %1208 = vmatpush1.bf16.msra.mxu0 0
        %1209 = vmatprep.subr.bf16.mxu0 0
        %1210 = vmatpush1.bf16.msra.mxu0 0
        %1211 = vmatprep.subr.bf16.mxu0 0
        %1212 = vmatpush1.bf16.msra.mxu0 0
        %1213 = vmatprep.subr.bf16.mxu0 0
        %1214 = vmatpush1.bf16.msra.mxu0 0
        %1215 = vmatprep.subr.bf16.mxu0 0
        %1216 = vmatpush1.bf16.msra.mxu0 0
        %1217 = vmatprep.subr.bf16.mxu0 0
        %1218 = vmatpush1.bf16.msra.mxu0 0
        %1219 = vmatprep.subr.bf16.mxu0 0
        %1220 = vmatpush1.bf16.msra.mxu0 0
        %1221 = vmatprep.subr.bf16.mxu0 0
        %1222 = vmatpush1.bf16.msra.mxu0 0
        %1223 = vmatprep.subr.bf16.mxu0 0
        %1224 = vmatpush1.bf16.msra.mxu0 0
        %1225 = vmatprep.subr.bf16.mxu0 0
        %1226 = vmatpush1.bf16.msra.mxu0 0
        %1227 = vmatprep.subr.bf16.mxu0 0
        %1228 = vmatpush1.bf16.msra.mxu0 0
        %1229 = vmatprep.subr.bf16.mxu0 0
        %1230 = vmatpush1.bf16.msra.mxu0 0
        %1231 = vmatprep.subr.bf16.mxu0 0
        %1232 = vmatpush1.bf16.msra.mxu0 0
        %1233 = vmatprep.subr.bf16.mxu0 0
        %1234 = vmatpush1.bf16.msra.mxu0 0
        %1235 = vmatprep.subr.bf16.mxu0 0
        %1236 = vmatpush1.bf16.msra.mxu0 0
        %1237 = vmatprep.mubr.bf16.mxu0 0
        %1238 = vmatmul.mubr.bf16.gmra.mrb[0].mxu0 %v1197
        %v1239 = vpop.f32.mrb[0].mxu0
        %v1240 = vadd.f32 0.0, %v1239
        %v1241 = vpop.f32.mrb[0].mxu0
        %v1242 = vadd.f32 0.0, %v1241
        %v1243 = vpop.f32.mrb[0].mxu0
        %v1244 = vpop.f32.mrb[0].mxu0
        %1245 = vdwg.mxu0
        %v1246 = vadd.f32 %v1174, %v1240
        %v1247 = vadd.f32 %v1175, %v1242
        %v1248 = vld [vmem:[#allocation3 + $0x4] sm:$0xff]
        %s1249 = scalar_lea.vmem %s3, 16
        %v1250 = vld [vmem:[%s1249] sm:$0xf]
        %v1252 = vunpack.c.l.b16 %v1248
        %v1253 = vunpack.c.h.b16 %v1248
        %v1254 = vpack.c.b16 %v1252, %v1252
        %v1255 = vpack.c.b16 %v1253, %v1253
        %v1257 = vsel %vm298, %v1250, 0
        %v1260 = vsel %vm302, %v1254, 0
        %v1263 = vsel %vm302, %v1255, 0
        %1265 = vmatprep.subr.bf16.mxu0 %v1263
        %1266 = vmatpush1.bf16.msra.mxu0 %v1260
        %1267 = vmatprep.subr.bf16.mxu0 0
        %1268 = vmatpush1.bf16.msra.mxu0 0
        %1269 = vmatprep.subr.bf16.mxu0 0
        %1270 = vmatpush1.bf16.msra.mxu0 0
        %1271 = vmatprep.subr.bf16.mxu0 0
        %1272 = vmatpush1.bf16.msra.mxu0 0
        %1273 = vmatprep.subr.bf16.mxu0 0
        %1274 = vmatpush1.bf16.msra.mxu0 0
        %1275 = vmatprep.subr.bf16.mxu0 0
        %1276 = vmatpush1.bf16.msra.mxu0 0
        %1277 = vmatprep.subr.bf16.mxu0 0
        %1278 = vmatpush1.bf16.msra.mxu0 0
        %1279 = vmatprep.subr.bf16.mxu0 0
        %1280 = vmatpush1.bf16.msra.mxu0 0
        %1281 = vmatprep.subr.bf16.mxu0 0
        %1282 = vmatpush1.bf16.msra.mxu0 0
        %1283 = vmatprep.subr.bf16.mxu0 0
        %1284 = vmatpush1.bf16.msra.mxu0 0
        %1285 = vmatprep.subr.bf16.mxu0 0
        %1286 = vmatpush1.bf16.msra.mxu0 0
        %1287 = vmatprep.subr.bf16.mxu0 0
        %1288 = vmatpush1.bf16.msra.mxu0 0
        %1289 = vmatprep.subr.bf16.mxu0 0
        %1290 = vmatpush1.bf16.msra.mxu0 0
        %1291 = vmatprep.subr.bf16.mxu0 0
        %1292 = vmatpush1.bf16.msra.mxu0 0
        %1293 = vmatprep.subr.bf16.mxu0 0
        %1294 = vmatpush1.bf16.msra.mxu0 0
        %1295 = vmatprep.subr.bf16.mxu0 0
        %1296 = vmatpush1.bf16.msra.mxu0 0
        %1297 = vmatprep.mubr.bf16.mxu0 0
        %1298 = vmatmul.mubr.bf16.gmra.mrb[0].mxu0 %v1257
        %v1299 = vpop.f32.mrb[0].mxu0
        %v1300 = vadd.f32 0.0, %v1299
        %v1301 = vpop.f32.mrb[0].mxu0
        %v1302 = vadd.f32 0.0, %v1301
        %v1303 = vpop.f32.mrb[0].mxu0
        %v1304 = vpop.f32.mrb[0].mxu0
        %1305 = vdwg.mxu0
        %v1306 = vadd.f32 %v1246, %v1300
        %v1307 = vadd.f32 %v1247, %v1302
        %v1308 = vld [vmem:[#allocation3 + $0x4] sm:$0xff]
        %v1309 = vld [vmem:[#allocation3 + $0xc] sm:$0xf]
        %v1310 = vsel %vm645, %v1308, 0
        %v1311 = vsel %vm646, %v1309, 0
        %s1312 = scalar_lea.vmem %s3, 20
        %v1313 = vld [vmem:[%s1312] sm:$0xf]
        %v1316 = vunpack.c.l.b16 %v1310
        %v1317 = vunpack.c.h.b16 %v1310
        %v1318 = vunpack.c.l.b16 %v1311
        %v1319 = vpack.c.b16 %v1316, %v1316
        %v1320 = vpack.c.b16 %v1317, %v1317
        %v1321 = vpack.c.b16 %v1318, %v1318
        %1322 = vrot.lane.b32.xlu0 %v1319, 127
        %v1323 = vpop.permute.xlu0 %1322
        %1324 = vrot.lane.b32.xlu0 %v1320, 127
        %v1325 = vpop.permute.xlu0 %1324
        %1326 = vrot.lane.b32.xlu0 %v1321, 127
        %v1327 = vpop.permute.xlu0 %1326
        %v1328 = vsel %vm502, %v1323, %v1325
        %v1329 = vsel %vm502, %v1325, %v1327
        %v1331 = vsel %vm298, %v1313, 0
        %v1334 = vsel %vm302, %v1328, 0
        %v1337 = vsel %vm302, %v1329, 0
        %1339 = vmatprep.subr.bf16.mxu0 %v1337
        %1340 = vmatpush1.bf16.msra.mxu0 %v1334
        %1341 = vmatprep.subr.bf16.mxu0 0
        %1342 = vmatpush1.bf16.msra.mxu0 0
        %1343 = vmatprep.subr.bf16.mxu0 0
        %1344 = vmatpush1.bf16.msra.mxu0 0
        %1345 = vmatprep.subr.bf16.mxu0 0
        %1346 = vmatpush1.bf16.msra.mxu0 0
        %1347 = vmatprep.subr.bf16.mxu0 0
        %1348 = vmatpush1.bf16.msra.mxu0 0
        %1349 = vmatprep.subr.bf16.mxu0 0
        %1350 = vmatpush1.bf16.msra.mxu0 0
        %1351 = vmatprep.subr.bf16.mxu0 0
        %1352 = vmatpush1.bf16.msra.mxu0 0
        %1353 = vmatprep.subr.bf16.mxu0 0
        %1354 = vmatpush1.bf16.msra.mxu0 0
        %1355 = vmatprep.subr.bf16.mxu0 0
        %1356 = vmatpush1.bf16.msra.mxu0 0
        %1357 = vmatprep.subr.bf16.mxu0 0
        %1358 = vmatpush1.bf16.msra.mxu0 0
        %1359 = vmatprep.subr.bf16.mxu0 0
        %1360 = vmatpush1.bf16.msra.mxu0 0
        %1361 = vmatprep.subr.bf16.mxu0 0
        %1362 = vmatpush1.bf16.msra.mxu0 0
        %1363 = vmatprep.subr.bf16.mxu0 0
        %1364 = vmatpush1.bf16.msra.mxu0 0
        %1365 = vmatprep.subr.bf16.mxu0 0
        %1366 = vmatpush1.bf16.msra.mxu0 0
        %1367 = vmatprep.subr.bf16.mxu0 0
        %1368 = vmatpush1.bf16.msra.mxu0 0
        %1369 = vmatprep.subr.bf16.mxu0 0
        %1370 = vmatpush1.bf16.msra.mxu0 0
        %1371 = vmatprep.mubr.bf16.mxu0 0
        %1372 = vmatmul.mubr.bf16.gmra.mrb[0].mxu0 %v1331
        %v1373 = vpop.f32.mrb[0].mxu0
        %v1374 = vadd.f32 0.0, %v1373
        %v1375 = vpop.f32.mrb[0].mxu0
        %v1376 = vadd.f32 0.0, %v1375
        %v1377 = vpop.f32.mrb[0].mxu0
        %v1378 = vpop.f32.mrb[0].mxu0
        %1379 = vdwg.mxu0
        %v1380 = vadd.f32 %v1306, %v1374
        %v1381 = vadd.f32 %v1307, %v1376
        %v1382 = vsel %vm723, %v1308, 0
        %v1383 = vsel %vm724, %v1309, 0
        %s1384 = scalar_lea.vmem %s3, 24
        %v1385 = vld [vmem:[%s1384] sm:$0xf]
        %v1388 = vunpack.c.l.b16 %v1382
        %v1389 = vunpack.c.h.b16 %v1382
        %v1390 = vunpack.c.l.b16 %v1383
        %v1391 = vpack.c.b16 %v1388, %v1388
        %v1392 = vpack.c.b16 %v1389, %v1389
        %v1393 = vpack.c.b16 %v1390, %v1390
        %1394 = vrot.lane.b32.xlu0 %v1391, 113
        %v1395 = vpop.permute.xlu0 %1394
        %1396 = vrot.lane.b32.xlu0 %v1392, 113
        %v1397 = vpop.permute.xlu0 %1396
        %1398 = vrot.lane.b32.xlu0 %v1393, 113
        %v1399 = vpop.permute.xlu0 %1398
        %v1400 = vsel %vm422, %v1395, %v1397
        %v1401 = vsel %vm422, %v1397, %v1399
        %v1403 = vsel %vm298, %v1385, 0
        %v1406 = vsel %vm302, %v1400, 0
        %v1409 = vsel %vm302, %v1401, 0
        %1411 = vmatprep.subr.bf16.mxu0 %v1409
        %1412 = vmatpush1.bf16.msra.mxu0 %v1406
        %1413 = vmatprep.subr.bf16.mxu0 0
        %1414 = vmatpush1.bf16.msra.mxu0 0
        %1415 = vmatprep.subr.bf16.mxu0 0
        %1416 = vmatpush1.bf16.msra.mxu0 0
        %1417 = vmatprep.subr.bf16.mxu0 0
        %1418 = vmatpush1.bf16.msra.mxu0 0
        %1419 = vmatprep.subr.bf16.mxu0 0
        %1420 = vmatpush1.bf16.msra.mxu0 0
        %1421 = vmatprep.subr.bf16.mxu0 0
        %1422 = vmatpush1.bf16.msra.mxu0 0
        %1423 = vmatprep.subr.bf16.mxu0 0
        %1424 = vmatpush1.bf16.msra.mxu0 0
        %1425 = vmatprep.subr.bf16.mxu0 0
        %1426 = vmatpush1.bf16.msra.mxu0 0
        %1427 = vmatprep.subr.bf16.mxu0 0
        %1428 = vmatpush1.bf16.msra.mxu0 0
        %1429 = vmatprep.subr.bf16.mxu0 0
        %1430 = vmatpush1.bf16.msra.mxu0 0
        %1431 = vmatprep.subr.bf16.mxu0 0
        %1432 = vmatpush1.bf16.msra.mxu0 0
        %1433 = vmatprep.subr.bf16.mxu0 0
        %1434 = vmatpush1.bf16.msra.mxu0 0
        %1435 = vmatprep.subr.bf16.mxu0 0
        %1436 = vmatpush1.bf16.msra.mxu0 0
        %1437 = vmatprep.subr.bf16.mxu0 0
        %1438 = vmatpush1.bf16.msra.mxu0 0
        %1439 = vmatprep.subr.bf16.mxu0 0
        %1440 = vmatpush1.bf16.msra.mxu0 0
        %1441 = vmatprep.subr.bf16.mxu0 0
        %1442 = vmatpush1.bf16.msra.mxu0 0
        %1443 = vmatprep.mubr.bf16.mxu0 0
        %1444 = vmatmul.mubr.bf16.gmra.mrb[0].mxu0 %v1403
        %v1445 = vpop.f32.mrb[0].mxu0
        %v1446 = vadd.f32 0.0, %v1445
        %v1447 = vpop.f32.mrb[0].mxu0
        %v1448 = vadd.f32 0.0, %v1447
        %v1449 = vpop.f32.mrb[0].mxu0
        %v1450 = vpop.f32.mrb[0].mxu0
        %1451 = vdwg.mxu0
        %v1452 = vadd.f32 %v1380, %v1446
        %v1453 = vadd.f32 %v1381, %v1448
        %s1454 = scalar_lea.vmem %s3, 28
        %v1455 = vld [vmem:[%s1454] sm:$0xf]
        %v1458 = vunpack.c.l.b16 %v1308
        %v1459 = vunpack.c.h.b16 %v1308
        %v1460 = vunpack.c.l.b16 %v1309
        %v1461 = vpack.c.b16 %v1458, %v1458
        %v1462 = vpack.c.b16 %v1459, %v1459
        %v1463 = vpack.c.b16 %v1460, %v1460
        %1464 = vrot.lane.b32.xlu0 %v1461, 112
        %v1465 = vpop.permute.xlu0 %1464
        %1466 = vrot.lane.b32.xlu0 %v1462, 112
        %v1467 = vpop.permute.xlu0 %1466
        %1468 = vrot.lane.b32.xlu0 %v1463, 112
        %v1469 = vpop.permute.xlu0 %1468
        %v1470 = vsel %vm813, %v1465, %v1467
        %v1471 = vsel %vm813, %v1467, %v1469
        %v1473 = vsel %vm298, %v1455, 0
        %v1476 = vsel %vm302, %v1470, 0
        %v1479 = vsel %vm302, %v1471, 0
        %1481 = vmatprep.subr.bf16.mxu0 %v1479
        %1482 = vmatpush1.bf16.msra.mxu0 %v1476
        %1483 = vmatprep.subr.bf16.mxu0 0
        %1484 = vmatpush1.bf16.msra.mxu0 0
        %1485 = vmatprep.subr.bf16.mxu0 0
        %1486 = vmatpush1.bf16.msra.mxu0 0
        %1487 = vmatprep.subr.bf16.mxu0 0
        %1488 = vmatpush1.bf16.msra.mxu0 0
        %1489 = vmatprep.subr.bf16.mxu0 0
        %1490 = vmatpush1.bf16.msra.mxu0 0
        %1491 = vmatprep.subr.bf16.mxu0 0
        %1492 = vmatpush1.bf16.msra.mxu0 0
        %1493 = vmatprep.subr.bf16.mxu0 0
        %1494 = vmatpush1.bf16.msra.mxu0 0
        %1495 = vmatprep.subr.bf16.mxu0 0
        %1496 = vmatpush1.bf16.msra.mxu0 0
        %1497 = vmatprep.subr.bf16.mxu0 0
        %1498 = vmatpush1.bf16.msra.mxu0 0
        %1499 = vmatprep.subr.bf16.mxu0 0
        %1500 = vmatpush1.bf16.msra.mxu0 0
        %1501 = vmatprep.subr.bf16.mxu0 0
        %1502 = vmatpush1.bf16.msra.mxu0 0
        %1503 = vmatprep.subr.bf16.mxu0 0
        %1504 = vmatpush1.bf16.msra.mxu0 0
        %1505 = vmatprep.subr.bf16.mxu0 0
        %1506 = vmatpush1.bf16.msra.mxu0 0
        %1507 = vmatprep.subr.bf16.mxu0 0
        %1508 = vmatpush1.bf16.msra.mxu0 0
        %1509 = vmatprep.subr.bf16.mxu0 0
        %1510 = vmatpush1.bf16.msra.mxu0 0
        %1511 = vmatprep.subr.bf16.mxu0 0
        %1512 = vmatpush1.bf16.msra.mxu0 0
        %1513 = vmatprep.mubr.bf16.mxu0 0
        %1514 = vmatmul.mubr.bf16.gmra.mrb[0].mxu0 %v1473
        %v1515 = vpop.f32.mrb[0].mxu0
        %v1516 = vadd.f32 0.0, %v1515
        %v1517 = vpop.f32.mrb[0].mxu0
        %v1518 = vadd.f32 0.0, %v1517
        %v1519 = vpop.f32.mrb[0].mxu0
        %v1520 = vpop.f32.mrb[0].mxu0
        %1521 = vdwg.mxu0
        %v1522 = vadd.f32 %v1452, %v1516
        %v1523 = vadd.f32 %v1453, %v1518
        %v1524 = vsel %vm872, %v1308, 0
        %v1525 = vsel %vm873, %v1309, 0
        %s1526 = scalar_lea.vmem %s3, 32
        %v1527 = vld [vmem:[%s1526] sm:$0xf]
        %v1530 = vunpack.c.l.b16 %v1524
        %v1531 = vunpack.c.h.b16 %v1524
        %v1532 = vunpack.c.l.b16 %v1525
        %v1533 = vpack.c.b16 %v1530, %v1530
        %v1534 = vpack.c.b16 %v1531, %v1531
        %v1535 = vpack.c.b16 %v1532, %v1532
        %1536 = vrot.lane.b32.xlu0 %v1533, 111
        %v1537 = vpop.permute.xlu0 %1536
        %1538 = vrot.lane.b32.xlu0 %v1534, 111
        %v1539 = vpop.permute.xlu0 %1538
        %1540 = vrot.lane.b32.xlu0 %v1535, 111
        %v1541 = vpop.permute.xlu0 %1540
        %v1542 = vsel %vm272, %v1537, %v1539
        %v1543 = vsel %vm272, %v1539, %v1541
        %v1545 = vsel %vm298, %v1527, 0
        %v1548 = vsel %vm302, %v1542, 0
        %v1551 = vsel %vm302, %v1543, 0
        %1553 = vmatprep.subr.bf16.mxu0 %v1551
        %1554 = vmatpush1.bf16.msra.mxu0 %v1548
        %1555 = vmatprep.subr.bf16.mxu0 0
        %1556 = vmatpush1.bf16.msra.mxu0 0
        %1557 = vmatprep.subr.bf16.mxu0 0
        %1558 = vmatpush1.bf16.msra.mxu0 0
        %1559 = vmatprep.subr.bf16.mxu0 0
        %1560 = vmatpush1.bf16.msra.mxu0 0
        %1561 = vmatprep.subr.bf16.mxu0 0
        %1562 = vmatpush1.bf16.msra.mxu0 0
        %1563 = vmatprep.subr.bf16.mxu0 0
        %1564 = vmatpush1.bf16.msra.mxu0 0
        %1565 = vmatprep.subr.bf16.mxu0 0
        %1566 = vmatpush1.bf16.msra.mxu0 0
        %1567 = vmatprep.subr.bf16.mxu0 0
        %1568 = vmatpush1.bf16.msra.mxu0 0
        %1569 = vmatprep.subr.bf16.mxu0 0
        %1570 = vmatpush1.bf16.msra.mxu0 0
        %1571 = vmatprep.subr.bf16.mxu0 0
        %1572 = vmatpush1.bf16.msra.mxu0 0
        %1573 = vmatprep.subr.bf16.mxu0 0
        %1574 = vmatpush1.bf16.msra.mxu0 0
        %1575 = vmatprep.subr.bf16.mxu0 0
        %1576 = vmatpush1.bf16.msra.mxu0 0
        %1577 = vmatprep.subr.bf16.mxu0 0
        %1578 = vmatpush1.bf16.msra.mxu0 0
        %1579 = vmatprep.subr.bf16.mxu0 0
        %1580 = vmatpush1.bf16.msra.mxu0 0
        %1581 = vmatprep.subr.bf16.mxu0 0
        %1582 = vmatpush1.bf16.msra.mxu0 0
        %1583 = vmatprep.subr.bf16.mxu0 0
        %1584 = vmatpush1.bf16.msra.mxu0 0
        %1585 = vmatprep.mubr.bf16.mxu0 0
        %1586 = vmatmul.mubr.bf16.gmra.mrb[0].mxu0 %v1545
        %v1587 = vpop.f32.mrb[0].mxu0
        %v1588 = vadd.f32 0.0, %v1587
        %v1589 = vpop.f32.mrb[0].mxu0
        %v1590 = vadd.f32 0.0, %v1589
        %v1591 = vpop.f32.mrb[0].mxu0
        %v1592 = vpop.f32.mrb[0].mxu0
        %1593 = vdwg.mxu0
        %v1594 = vadd.f32 %v1522, %v1588
        %v1595 = vadd.f32 %v1523, %v1590
        %v1596 = vld [vmem:[%s4] sm:$0xff]
        %1598 = vset.pattern.permute.xlu0 0
        %1599 = vperm.xlu0 %1598, %v1596
        %v1600 = vpop.permute.xlu0 %1599
        %v1602 = vadd.f32 %v1594, %v1600
        %v1603 = vadd.f32 %v1595, %v1600
        %v1604 = vld [vmem:[%s222] sm:$0xff]
        %v1605 = vunpack.c.l.bf16 %v1604
        %v1606 = vunpack.c.h.bf16 %v1604
        %v1607 = vadd.f32 %v1602, %v1605
        %v1608 = vadd.f32 %v1603, %v1606
        %v1609 = vmax.f32 %v1607, 0.0
        %v1610 = vmax.f32 %v1608, 0.0
        %v1611 = vpack.c.bf16 %v1609, %v1609
        %v1612 = vpack.c.bf16 %v1610, %v1610
        %v1615 = vunpack.c.l.b16 %v1611
        %v1616 = vunpack.c.l.b16 %v1612
        %v1617 = vpack.c.b16 %v1616, %v1615
        %1619 = vst [vmem:[%s217] sm:$0xff] %v1617
        %s1620 = sand.u32 %s137, 1
        %s1621 = scalar_lea.sflag [#allocation5], %s1620
        %s1622 = sand.u32 %s137, 1
        %s1623 = smul.addr %s1622, 8
        %s1624 = scalar_lea.vmem [#allocation4], %s1623
        // Predicated region
        $region41: #{tpu_custom_call.1} parent=39 // pred_check
          %p1625 = pneg %p147
        $region42: #{tpu_custom_call.1} parent=39 // pred_check_branch
          %1627 = sbr.rel (%p1625) target = $region44
        $region43: #{tpu_custom_call.1} parent=39 // pred_region
          %s1629 = ssub.s32 128, 128
          %1630 = vsyncadd %s1621, %s1629
          %s1631 = smul.addr %s19, 2
          %s1632 = smul.addr %s1631, 64
          %s1633 = scalar_lea.hbm %s5, %s1632
          %s1635 = sshll.u32 %s1624, 4
          %s1636 = int_to_ptr.vmem [resolvable:$true] %s1635
          %1638 = dma.vmem_to_hbm [thread:$0]  %s1636, 128, %s1633, %s1621
        $region44: #{tpu_custom_call.1} parent=39 // pred_fallthru
          _
      $region40: #{tpu_custom_call.1} parent=5 // pred_fallthru
        _
      %p1639 = scmp.le.s32.totalorder 2, %s14
      // Predicated region
      $region45: #{tpu_custom_call.1} parent=5 // pred_check
        %p1640 = pneg %p1639
      $region46: #{tpu_custom_call.1} parent=5 // pred_check_branch
        %1642 = sbr.rel (%p1640) target = $region48
      $region47: #{tpu_custom_call.1} parent=5 // pred_region
        %s1643 = ssub.s32 %s14, 2
        // Predicated region
        $region49: #{tpu_custom_call.1} parent=47 // pred_check
          %p1644 = pneg %p153
        $region50: #{tpu_custom_call.1} parent=47 // pred_check_branch
          %1646 = sbr.rel (%p1644) target = $region52
        $region51: #{tpu_custom_call.1} parent=47 // pred_region
          %s1647 = sand.u32 %s138, 1
          %s1648 = scalar_lea.sflag [#allocation5], %s1647
          %s1649 = sand.u32 %s138, 1
          %s1650 = smul.addr %s1649, 8
          %s1651 = scalar_lea.vmem [#allocation4], %s1650
          %1652 = dma.done %s1648, 128
        $region52: #{tpu_custom_call.1} parent=47 // pred_fallthru
          _
      $region48: #{tpu_custom_call.1} parent=5 // pred_fallthru
        _
    $region6: #{tpu_custom_call.1} parent=1 // loop_footer
      %s18 = sadd.s32 1, %s14
    $region7: #{tpu_custom_call.1} parent=1 // loop_footer_branch
      %13 = sbr.rel target = $region3
    $region8: #{tpu_custom_call.1} parent=1 // loop_exit
      _
    %1653 = vsyncpa [#allocation5], 1
    %s1654 = scalar_lea.sflag [#allocation5], 1
    %1655 = vsyncpa %s1654, 1

</llo_original>
